<compile_context>
chip_gen: v6e
topology: v6e:2x2x1
jax: 0.10.0
libtpu: 0.0.40
codegen_flags: <defaults>
</compile_context>

<pallas_src>
import functools

import jax
import jax.numpy as jnp
from jax.experimental import pallas as pl
from jax.experimental.pallas import tpu as pltpu

_MAX_UNROLL_STEPS = 8      # timesteps unrolled per grid iteration when T > 16
_SINGLE_BLOCK_MAX = 16     # rollouts this short run as a single grid step


def _lstm_seq_kernel(num_layers, hidden, seq_len, steps_per_block,
                     xw0_ref, mask_ref, rhs_in_ref, w_hh0_ref, w_rest_ref,
                     b_ref, x_out_ref, rhs_out_ref, hc_ref):
    """One grid step = `steps_per_block` timesteps of the stacked LSTM.

    xw0_ref:     (Tb, N, 4H)  precomputed x @ W_ih0^T for this block (streamed)
    mask_ref:    (Tb, N, 1)   1 - done for this block (streamed)
    rhs_in_ref:  (N, 2L, H)   initial recurrent state, PyTorch layout (resident)
    w_hh0_ref:   (H, 4H)      layer-0 W_hh^T, bf16 (resident)
    w_rest_ref:  (max(L-1,1), 2H, 4H) fused [W_ih^T; W_hh^T] for layers>=1 (resident)
    b_ref:       (L, 1, 4H)   b_ih + b_hh per layer, f32 (resident)
    x_out_ref:   (Tb, N, H)   top-layer hidden output for this block
    rhs_out_ref: (N, 2L, H)   final recurrent state (resident)
    hc_ref:      (2L, N, H)   f32 VMEM scratch carrying (h, c) across grid steps
    """
    L, H, T, Tb = num_layers, hidden, seq_len, steps_per_block
    N = xw0_ref.shape[1]
    blk = pl.program_id(0)

    @pl.when(blk == 0)
    def _load_initial_state():
        # (N, 2L, H) boundary layout -> (2L, N, H) carry; 2L = 6 so the strided
        # copies are negligible (would move to the wrapper only if 2L grew > ~8).
        for l in range(2 * L):
            hc_ref[l] = rhs_in_ref[:, l, :]

    def _step(tt):
        # masks = 1 - done precomputed in the wrapper; one (N,1)->(N,H)
        # broadcast per step, hoisted out of the unrolled layer loop.
        mask = jnp.broadcast_to(mask_ref[tt], (N, H))
        x = None
        for l in range(L):                       # small static -> unrolled
            h_prev = hc_ref[l] * mask
            c_prev = hc_ref[L + l] * mask
            if l == 0:
                # Input projection for layer 0 was hoisted to one big wrapper
                # GEMM; only the recurrent contraction stays on the serial path.
                gates = (xw0_ref[tt]
                         + jnp.dot(h_prev.astype(jnp.bfloat16), w_hh0_ref[...],
                                   preferred_element_type=jnp.float32)
                         + b_ref[0])             # (N, 4H) f32
            else:
                # Single fused MXU contraction [x, h] @ [W_ih^T; W_hh^T]
                # (256-deep: one pass on v6e/v7x's 256-wide MXU).
                lhs = jnp.concatenate([x, h_prev], axis=-1).astype(jnp.bfloat16)
                gates = (jnp.dot(lhs, w_rest_ref[l - 1],
                                 preferred_element_type=jnp.float32)
                         + b_ref[l])
            # PyTorch gate order [i, f, g, o]; elementwise math stays f32.
            i_g = jax.nn.sigmoid(gates[:, 0 * H:1 * H])
            f_g = jax.nn.sigmoid(gates[:, 1 * H:2 * H])
            g_g = jnp.tanh(gates[:, 2 * H:3 * H])
            o_g = jax.nn.sigmoid(gates[:, 3 * H:4 * H])
            c_new = f_g * c_prev + i_g * g_g
            h_new = o_g * jnp.tanh(c_new)
            hc_ref[l] = h_new
            hc_ref[L + l] = c_new
            x = h_new                            # dropout == 0.0
        x_out_ref[tt] = x

    # Static unroll over the block; only a ragged last block needs the guard.
    needs_guard = (T % Tb) != 0
    for tt in range(Tb):
        if needs_guard:
            t_glob = blk * Tb + tt

            @pl.when(t_glob < T)
            def _(tt=tt):
                _step(tt)
        else:
            _step(tt)

    @pl.when(blk == pl.num_programs(0) - 1)
    def _store_final_state():
        # (2L, N, H) carry -> (N, 2L, H) PyTorch layout.
        for l in range(2 * L):
            rhs_out_ref[:, l, :] = hc_ref[l]


@functools.partial(jax.jit, static_argnames=("num_layers", "hidden"))
def lstm_net_forward(inputs, rhs, done, fused_params, *, num_layers, hidden):
    """Matches LstmNet.forward for both the single-step and rollout branches.

    inputs: (N, ...) or (T*N, ...) observations (flattened internally)
    rhs:    (N, 2*num_layers, hidden) recurrent state (PyTorch layout)
    done:   (N, 1) or (T*N, 1) done flags (time-major flattening: index t*N+n)
    returns (x, rhs_new): x is (N, hidden) or (T*N, hidden);
            rhs_new is (N, 2*num_layers, hidden).
    """
    w_ih0, w_hh0, w_rest, b = fused_params
    L, H = num_layers, hidden
    N = rhs.shape[0]
    total = inputs.shape[0]
    assert total % N == 0
    T = total // N

    x = inputs.reshape(total, -1).astype(jnp.float32)

    # Layer-0 input projection for the whole rollout: one (T*N, D) x (D, 4H)
    # GEMM with full MXU row utilization instead of T tiny 8-row pushes on the
    # sequential critical path (valid: the done mask touches h/c, never x).
    xw0 = jnp.dot(x.astype(jnp.bfloat16), w_ih0,
                  preferred_element_type=jnp.float32).reshape(T, N, 4 * H)

    mask = (1.0 - done.astype(jnp.float32)).reshape(T, N, 1)
    rhs_f32 = rhs.astype(jnp.float32)

    # Block multiple timesteps per grid iteration: per-step compute at N=8,
    # H=128 is a few hundred ns, so the ~0.35us per-grid-step fixed cost
    # dominates.  Short rollouts collapse to a single invocation.
    Tb = T if T <= _SINGLE_BLOCK_MAX else _MAX_UNROLL_STEPS
    n_blk = pl.cdiv(T, Tb)
    Tpad = n_blk * Tb
    if Tpad != T:
        pad = ((0, Tpad - T), (0, 0), (0, 0))
        xw0 = jnp.pad(xw0, pad)
        mask = jnp.pad(mask, pad, constant_values=1.0)   # value irrelevant (guarded)

    kernel = functools.partial(_lstm_seq_kernel, L, H, T, Tb)

    grid_spec = pltpu.PrefetchScalarGridSpec(
        num_scalar_prefetch=0,
        grid=(n_blk,),
        in_specs=[
            pl.BlockSpec((Tb, N, 4 * H), lambda t: (t, 0, 0)),          # xw0 block
            pl.BlockSpec((Tb, N, 1), lambda t: (t, 0, 0)),              # mask block
            pl.BlockSpec((N, 2 * L, H), lambda t: (0, 0, 0)),           # rhs (resident)
            pl.BlockSpec((H, 4 * H), lambda t: (0, 0)),                 # W_hh0 (resident)
            pl.BlockSpec((w_rest.shape[0], 2 * H, 4 * H),
                         lambda t: (0, 0, 0)),                          # fused W (resident)
            pl.BlockSpec((L, 1, 4 * H), lambda t: (0, 0, 0)),           # bias (resident)
        ],
        out_specs=(
            pl.BlockSpec((Tb, N, H), lambda t: (t, 0, 0)),              # per-block output
            pl.BlockSpec((N, 2 * L, H), lambda t: (0, 0, 0)),           # final state (resident)
        ),
        scratch_shapes=[pltpu.VMEM((2 * L, N, H), jnp.float32)],
    )

    x_out, rhs_out = pl.pallas_call(
        kernel,
        out_shape=(
            jax.ShapeDtypeStruct((Tpad, N, H), jnp.float32),
            jax.ShapeDtypeStruct((N, 2 * L, H), jnp.float32),
        ),
        grid_spec=grid_spec,
        compiler_params=pltpu.CompilerParams(
            dimension_semantics=("arbitrary",)),        # sequential (h, c) carry
    )(xw0, mask, rhs_f32, w_hh0, w_rest, b)

    return x_out[:T].reshape(total, H), rhs_out


def init_lstm_params(key, input_size, hidden, num_layers):
    """PyTorch nn.LSTM-style uniform(-1/sqrt(H), 1/sqrt(H)) init.

    Returns a list of per-layer (w_ih, w_hh, b_ih, b_hh) with PyTorch shapes:
    layer 0 w_ih is (4H, input_size), later layers (4H, H); gate order [i,f,g,o].
    """
    bound = 1.0 / float(hidden) ** 0.5
    params = []
    for l in range(num_layers):
        k1, k2, k3, k4 = jax.random.split(jax.random.fold_in(key, l), 4)
        in_l = input_size if l == 0 else hidden
        w_ih = jax.random.uniform(k1, (4 * hidden, in_l), jnp.float32, -bound, bound)
        w_hh = jax.random.uniform(k2, (4 * hidden, hidden), jnp.float32, -bound, bound)
        b_ih = jax.random.uniform(k3, (4 * hidden,), jnp.float32, -bound, bound)
        b_hh = jax.random.uniform(k4, (4 * hidden,), jnp.float32, -bound, bound)
        params.append((w_ih, w_hh, b_ih, b_hh))
    return params


def fuse_lstm_params(params, *, num_layers, hidden):
    """One-time prep: pre-transpose + fuse + cast the weights.

    Returns (w_ih0, w_hh0, w_rest, b):
      w_ih0:  (D, 4H)            bf16 (used by the wrapper's hoisted layer-0 GEMM)
      w_hh0:  (H, 4H)            bf16
      w_rest: (max(L-1,1), 2H, 4H) bf16 == concat([W_ih^T, W_hh^T]) per layer >= 1
      b:      (L, 1, 4H)         f32  == b_ih + b_hh
    bf16 weights deviate slightly from the f32 PyTorch reference; accumulation
    stays f32 inside the kernel.
    """
    L, H = num_layers, hidden
    w_ih0 = params[0][0].T.astype(jnp.bfloat16)
    w_hh0 = params[0][1].T.astype(jnp.bfloat16)
    if L > 1:
        w_rest = jnp.stack(
            [jnp.concatenate([params[l][0].T, params[l][1].T], axis=0)
             for l in range(1, L)]).astype(jnp.bfloat16)
    else:
        w_rest = jnp.zeros((1, 2 * H, 4 * H), jnp.bfloat16)   # unused placeholder
    b = jnp.stack([(params[l][2] + params[l][3]).reshape(1, 4 * H)
                   for l in range(L)]).astype(jnp.float32)
    return w_ih0, w_hh0, w_rest, b


def lstm_net_reference(inputs, rhs, done, fused_params, *, num_layers, hidden):
    """Pure-JAX reference mirroring the kernel's numerics (bf16 matmul inputs)."""
    w_ih0, w_hh0, w_rest, b = fused_params
    L, H = num_layers, hidden
    N = rhs.shape[0]
    total = inputs.shape[0]
    T = total // N
    x = inputs.reshape(total, -1).astype(jnp.float32).reshape(T, N, -1)
    mask = (1.0 - done.astype(jnp.float32)).reshape(T, N, 1)
    h = [rhs[:, l, :].astype(jnp.float32) for l in range(L)]
    c = [rhs[:, L + l, :].astype(jnp.float32) for l in range(L)]
    outs = []
    for t in range(T):
        m = mask[t]
        inp = x[t]
        for l in range(L):
            hp = h[l] * m
            cp = c[l] * m
            if l == 0:
                gates = (jnp.dot(inp.astype(jnp.bfloat16), w_ih0,
                                 preferred_element_type=jnp.float32)
                         + jnp.dot(hp.astype(jnp.bfloat16), w_hh0,
                                   preferred_element_type=jnp.float32)
                         + b[0])
            else:
                lhs = jnp.concatenate([inp, hp], axis=-1).astype(jnp.bfloat16)
                gates = jnp.dot(lhs, w_rest[l - 1],
                                preferred_element_type=jnp.float32) + b[l]
            i_g = jax.nn.sigmoid(gates[:, :H])
            f_g = jax.nn.sigmoid(gates[:, H:2 * H])
            g_g = jnp.tanh(gates[:, 2 * H:3 * H])
            o_g = jax.nn.sigmoid(gates[:, 3 * H:])
            c[l] = f_g * cp + i_g * g_g
            h[l] = o_g * jnp.tanh(c[l])
            inp = h[l]
        outs.append(inp)
    x_out = jnp.stack(outs, axis=0).reshape(total, H)
    rhs_out = jnp.stack(h + c, axis=1)
    return x_out, rhs_out


if __name__ == "__main__":
    # Small shapes: batch N=8, obs (2, 8, 8) -> input_size=128, hidden=128, 3 layers.
    N = 8
    C, Hh, Ww = 2, 8, 8
    INPUT_SIZE = C * Hh * Ww          # 128
    HIDDEN = 128
    NUM_LAYERS = 3

    key = jax.random.PRNGKey(0)
    (k_par, k_in, k_rhs, k_done,
     k_seq, k_sd, k_seq2, k_sd2) = jax.random.split(key, 8)

    params = init_lstm_params(k_par, INPUT_SIZE, HIDDEN, NUM_LAYERS)
    fused = fuse_lstm_params(params, num_layers=NUM_LAYERS, hidden=HIDDEN)

    rhs = jax.random.normal(k_rhs, (N, 2 * NUM_LAYERS, HIDDEN), jnp.float32)

    TOL = dict(atol=2e-2, rtol=2e-2)

    # --- single-step (acting) branch: x.shape[0] == rhs.shape[0] ---
    inputs = jax.random.normal(k_in, (N, C, Hh, Ww), jnp.float32)
    done = (jax.random.uniform(k_done, (N, 1)) < 0.25).astype(jnp.float32)
    x1, rhs1 = lstm_net_forward(inputs, rhs, done, fused,
                                num_layers=NUM_LAYERS, hidden=HIDDEN)
    jax.block_until_ready((x1, rhs1))
    x1r, rhs1r = lstm_net_reference(inputs, rhs, done, fused,
                                    num_layers=NUM_LAYERS, hidden=HIDDEN)
    assert x1.shape == (N, HIDDEN) and rhs1.shape == (N, 2 * NUM_LAYERS, HIDDEN)
    assert jnp.allclose(x1, x1r, **TOL) and jnp.allclose(rhs1, rhs1r, **TOL)

    # --- T-step rollout, T=4 (single grid step) ---
    T = 4
    seq_inputs = jax.random.normal(k_seq, (T * N, C, Hh, Ww), jnp.float32)
    seq_done = (jax.random.uniform(k_sd, (T * N, 1)) < 0.1).astype(jnp.float32)
    x2, rhs2 = lstm_net_forward(seq_inputs, rhs, seq_done, fused,
                                num_layers=NUM_LAYERS, hidden=HIDDEN)
    jax.block_until_ready((x2, rhs2))
    x2r, rhs2r = lstm_net_reference(seq_inputs, rhs, seq_done, fused,
                                    num_layers=NUM_LAYERS, hidden=HIDDEN)
    assert x2.shape == (T * N, HIDDEN)
    assert jnp.allclose(x2, x2r, **TOL) and jnp.allclose(rhs2, rhs2r, **TOL)

    # --- T-step rollout, T=20 (multi-block grid + ragged-tail guard) ---
    T = 20
    seq_inputs = jax.random.normal(k_seq2, (T * N, C, Hh, Ww), jnp.float32)
    seq_done = (jax.random.uniform(k_sd2, (T * N, 1)) < 0.1).astype(jnp.float32)
    x3, rhs3 = lstm_net_forward(seq_inputs, rhs, seq_done, fused,
                                num_layers=NUM_LAYERS, hidden=HIDDEN)
    jax.block_until_ready((x3, rhs3))
    x3r, rhs3r = lstm_net_reference(seq_inputs, rhs, seq_done, fused,
                                    num_layers=NUM_LAYERS, hidden=HIDDEN)
    assert x3.shape == (T * N, HIDDEN)
    assert jnp.allclose(x3, x3r, **TOL) and jnp.allclose(rhs3, rhs3r, **TOL)

    print("KERNEL_OK")
</pallas_src>

<mosaic_0001>
module attributes {stable_mosaic.version = 11 : i64} {
  func.func @_lstm_seq_kernel(%arg0: i32, %arg1: memref<1x8x512xf32, #tpu.memory_space<vmem>>, %arg2: memref<1x8x1xf32, #tpu.memory_space<vmem>>, %arg3: memref<8x6x128xf32, #tpu.memory_space<vmem>>, %arg4: memref<128x512xbf16, #tpu.memory_space<vmem>>, %arg5: memref<2x256x512xbf16, #tpu.memory_space<vmem>>, %arg6: memref<3x1x512xf32, #tpu.memory_space<vmem>>, %arg7: memref<1x8x128xf32, #tpu.memory_space<vmem>>, %arg8: memref<8x6x128xf32, #tpu.memory_space<vmem>>, %arg9: memref<6x8x128xf32, #tpu.memory_space<vmem>>) attributes {dimension_semantics = [#tpu.dimension_semantics<arbitrary>], iteration_bounds = array<i64: 1>, scalar_prefetch = 0 : i64, scratch_operands = 1 : i64, tpu.core_type = #tpu.core_type<tc>, window_params = [{transform_indices = @transform_0, window_bounds = array<i64: 1, 8, 512>}, {transform_indices = @transform_1, window_bounds = array<i64: 1, 8, 1>}, {pipeline_mode = #tpu.pipeline_mode<synchronous>, transform_indices = @transform_2, window_bounds = array<i64: 8, 6, 128>}, {pipeline_mode = #tpu.pipeline_mode<synchronous>, transform_indices = @transform_3, window_bounds = array<i64: 128, 512>}, {pipeline_mode = #tpu.pipeline_mode<synchronous>, transform_indices = @transform_4, window_bounds = array<i64: 2, 256, 512>}, {pipeline_mode = #tpu.pipeline_mode<synchronous>, transform_indices = @transform_5, window_bounds = array<i64: 3, 1, 512>}, {transform_indices = @transform_6, window_bounds = array<i64: 1, 8, 128>}, {pipeline_mode = #tpu.pipeline_mode<synchronous>, transform_indices = @transform_7, window_bounds = array<i64: 8, 6, 128>}]} {
    %c0_i32 = arith.constant 0 : i32
    %0 = arith.cmpi eq, %arg0, %c0_i32 : i32
    %1 = arith.extui %0 : i1 to i32
    %c0_i32_0 = arith.constant 0 : i32
    %2 = arith.cmpi ne, %1, %c0_i32_0 : i32
    scf.if %2 {
      %c0_70 = arith.constant 0 : index
      %c0_71 = arith.constant 0 : index
      %c0_72 = arith.constant 0 : index
      %152 = vector.load %arg3[%c0_70, %c0_71, %c0_72] : memref<8x6x128xf32, #tpu.memory_space<vmem>>, vector<8x1x128xf32>
      %153 = vector.shape_cast %152 : vector<8x1x128xf32> to vector<8x128xf32>
      %c0_73 = arith.constant 0 : index
      %c0_74 = arith.constant 0 : index
      %c0_75 = arith.constant 0 : index
      %154 = vector.load %arg9[%c0_73, %c0_74, %c0_75] : memref<6x8x128xf32, #tpu.memory_space<vmem>>, vector<1x8x128xf32>
      %155 = vector.shape_cast %154 : vector<1x8x128xf32> to vector<8x128xf32>
      %156 = vector.shape_cast %153 : vector<8x128xf32> to vector<1x8x128xf32>
      tpu.vector_store %arg9[%c0_73, %c0_74, %c0_75], %156 {strides = array<i32>} : memref<6x8x128xf32, #tpu.memory_space<vmem>>, vector<1x8x128xf32>,
      %c0_76 = arith.constant 0 : index
      %c1_77 = arith.constant 1 : index
      %c0_78 = arith.constant 0 : index
      %157 = vector.load %arg3[%c0_76, %c1_77, %c0_78] : memref<8x6x128xf32, #tpu.memory_space<vmem>>, vector<8x1x128xf32>
      %158 = vector.shape_cast %157 : vector<8x1x128xf32> to vector<8x128xf32>
      %c1_79 = arith.constant 1 : index
      %c0_80 = arith.constant 0 : index
      %c0_81 = arith.constant 0 : index
      %159 = vector.load %arg9[%c1_79, %c0_80, %c0_81] : memref<6x8x128xf32, #tpu.memory_space<vmem>>, vector<1x8x128xf32>
      %160 = vector.shape_cast %159 : vector<1x8x128xf32> to vector<8x128xf32>
      %161 = vector.shape_cast %158 : vector<8x128xf32> to vector<1x8x128xf32>
      tpu.vector_store %arg9[%c1_79, %c0_80, %c0_81], %161 {strides = array<i32>} : memref<6x8x128xf32, #tpu.memory_space<vmem>>, vector<1x8x128xf32>,
      %c0_82 = arith.constant 0 : index
      %c2_83 = arith.constant 2 : index
      %c0_84 = arith.constant 0 : index
      %162 = vector.load %arg3[%c0_82, %c2_83, %c0_84] : memref<8x6x128xf32, #tpu.memory_space<vmem>>, vector<8x1x128xf32>
      %163 = vector.shape_cast %162 : vector<8x1x128xf32> to vector<8x128xf32>
      %c2_85 = arith.constant 2 : index
      %c0_86 = arith.constant 0 : index
      %c0_87 = arith.constant 0 : index
      %164 = vector.load %arg9[%c2_85, %c0_86, %c0_87] : memref<6x8x128xf32, #tpu.memory_space<vmem>>, vector<1x8x128xf32>
      %165 = vector.shape_cast %164 : vector<1x8x128xf32> to vector<8x128xf32>
      %166 = vector.shape_cast %163 : vector<8x128xf32> to vector<1x8x128xf32>
      tpu.vector_store %arg9[%c2_85, %c0_86, %c0_87], %166 {strides = array<i32>} : memref<6x8x128xf32, #tpu.memory_space<vmem>>, vector<1x8x128xf32>,
      %c0_88 = arith.constant 0 : index
      %c3_89 = arith.constant 3 : index
      %c0_90 = arith.constant 0 : index
      %167 = vector.load %arg3[%c0_88, %c3_89, %c0_90] : memref<8x6x128xf32, #tpu.memory_space<vmem>>, vector<8x1x128xf32>
      %168 = vector.shape_cast %167 : vector<8x1x128xf32> to vector<8x128xf32>
      %c3_91 = arith.constant 3 : index
      %c0_92 = arith.constant 0 : index
      %c0_93 = arith.constant 0 : index
      %169 = vector.load %arg9[%c3_91, %c0_92, %c0_93] : memref<6x8x128xf32, #tpu.memory_space<vmem>>, vector<1x8x128xf32>
      %170 = vector.shape_cast %169 : vector<1x8x128xf32> to vector<8x128xf32>
      %171 = vector.shape_cast %168 : vector<8x128xf32> to vector<1x8x128xf32>
      tpu.vector_store %arg9[%c3_91, %c0_92, %c0_93], %171 {strides = array<i32>} : memref<6x8x128xf32, #tpu.memory_space<vmem>>, vector<1x8x128xf32>,
      %c0_94 = arith.constant 0 : index
      %c4_95 = arith.constant 4 : index
      %c0_96 = arith.constant 0 : index
      %172 = vector.load %arg3[%c0_94, %c4_95, %c0_96] : memref<8x6x128xf32, #tpu.memory_space<vmem>>, vector<8x1x128xf32>
      %173 = vector.shape_cast %172 : vector<8x1x128xf32> to vector<8x128xf32>
      %c4_97 = arith.constant 4 : index
      %c0_98 = arith.constant 0 : index
      %c0_99 = arith.constant 0 : index
      %174 = vector.load %arg9[%c4_97, %c0_98, %c0_99] : memref<6x8x128xf32, #tpu.memory_space<vmem>>, vector<1x8x128xf32>
      %175 = vector.shape_cast %174 : vector<1x8x128xf32> to vector<8x128xf32>
      %176 = vector.shape_cast %173 : vector<8x128xf32> to vector<1x8x128xf32>
      tpu.vector_store %arg9[%c4_97, %c0_98, %c0_99], %176 {strides = array<i32>} : memref<6x8x128xf32, #tpu.memory_space<vmem>>, vector<1x8x128xf32>,
      %c0_100 = arith.constant 0 : index
      %c5_101 = arith.constant 5 : index
      %c0_102 = arith.constant 0 : index
      %177 = vector.load %arg3[%c0_100, %c5_101, %c0_102] : memref<8x6x128xf32, #tpu.memory_space<vmem>>, vector<8x1x128xf32>
      %178 = vector.shape_cast %177 : vector<8x1x128xf32> to vector<8x128xf32>
      %c5_103 = arith.constant 5 : index
      %c0_104 = arith.constant 0 : index
      %c0_105 = arith.constant 0 : index
      %179 = vector.load %arg9[%c5_103, %c0_104, %c0_105] : memref<6x8x128xf32, #tpu.memory_space<vmem>>, vector<1x8x128xf32>
      %180 = vector.shape_cast %179 : vector<1x8x128xf32> to vector<8x128xf32>
      %181 = vector.shape_cast %178 : vector<8x128xf32> to vector<1x8x128xf32>
      tpu.vector_store %arg9[%c5_103, %c0_104, %c0_105], %181 {strides = array<i32>} : memref<6x8x128xf32, #tpu.memory_space<vmem>>, vector<1x8x128xf32>,
    } else {
    }
    %c0 = arith.constant 0 : index
    %c0_1 = arith.constant 0 : index
    %c0_2 = arith.constant 0 : index
    %3 = vector.load %arg2[%c0, %c0_1, %c0_2] : memref<1x8x1xf32, #tpu.memory_space<vmem>>, vector<1x8x1xf32>
    %4 = vector.shape_cast %3 : vector<1x8x1xf32> to vector<8x1xf32>
    %5 = vector.shape_cast %4 : vector<8x1xf32> to vector<8x1xf32>
    %6 = vector.broadcast %5 : vector<8x1xf32> to vector<8x128xf32>
    %c0_3 = arith.constant 0 : index
    %c0_4 = arith.constant 0 : index
    %c0_5 = arith.constant 0 : index
    %7 = vector.load %arg9[%c0_3, %c0_4, %c0_5] : memref<6x8x128xf32, #tpu.memory_space<vmem>>, vector<1x8x128xf32>
    %8 = vector.shape_cast %7 : vector<1x8x128xf32> to vector<8x128xf32>
    %9 = arith.mulf %8, %6 : vector<8x128xf32>
    %c3 = arith.constant 3 : index
    %c0_6 = arith.constant 0 : index
    %c0_7 = arith.constant 0 : index
    %10 = vector.load %arg9[%c3, %c0_6, %c0_7] : memref<6x8x128xf32, #tpu.memory_space<vmem>>, vector<1x8x128xf32>
    %11 = vector.shape_cast %10 : vector<1x8x128xf32> to vector<8x128xf32>
    %12 = arith.mulf %11, %6 : vector<8x128xf32>
    %c0_8 = arith.constant 0 : index
    %c0_9 = arith.constant 0 : index
    %c0_10 = arith.constant 0 : index
    %13 = vector.load %arg1[%c0_8, %c0_9, %c0_10] : memref<1x8x512xf32, #tpu.memory_space<vmem>>, vector<1x8x512xf32>
    %14 = vector.shape_cast %13 : vector<1x8x512xf32> to vector<8x512xf32>
    %15 = arith.truncf %9 : vector<8x128xf32> to vector<8x128xbf16>
    %c0_11 = arith.constant 0 : index
    %c0_12 = arith.constant 0 : index
    %16 = vector.load %arg4[%c0_11, %c0_12] : memref<128x512xbf16, #tpu.memory_space<vmem>>, vector<128x512xbf16>
    %cst = arith.constant dense<0.000000e+00> : vector<8x512xf32>
    %17 = tpu.matmul %15, %16, %cst {dimension_numbers = #tpu.dot_dimension_numbers<[1], [0], [0], [1], [0, 0, 1, 1], [], []>} : vector<8x128xbf16>, vector<128x512xbf16>, vector<8x512xf32> -> vector<8x512xf32>
    %18 = arith.addf %14, %17 : vector<8x512xf32>
    %c0_13 = arith.constant 0 : index
    %c0_14 = arith.constant 0 : index
    %c0_15 = arith.constant 0 : index
    %19 = vector.load %arg6[%c0_13, %c0_14, %c0_15] : memref<3x1x512xf32, #tpu.memory_space<vmem>>, vector<1x1x512xf32>
    %20 = vector.shape_cast %19 : vector<1x1x512xf32> to vector<1x512xf32>
    %21 = vector.broadcast %20 : vector<1x512xf32> to vector<8x512xf32>
    %22 = arith.addf %18, %21 : vector<8x512xf32>
    %23 = vector.extract_strided_slice %22 {offsets = [0, 0], sizes = [8, 128], strides = [1, 1]} : vector<8x512xf32> to vector<8x128xf32>
    %24 = arith.negf %23 : vector<8x128xf32>
    %25 = math.exp %24 : vector<8x128xf32>
    %cst_16 = arith.constant 1.000000e+00 : f32
    %26 = vector.broadcast %cst_16 : f32 to vector<8x128xf32>
    %27 = arith.addf %26, %25 : vector<8x128xf32>
    %28 = arith.divf %26, %27 : vector<8x128xf32>
    %29 = vector.extract_strided_slice %22 {offsets = [0, 128], sizes = [8, 128], strides = [1, 1]} : vector<8x512xf32> to vector<8x128xf32>
    %30 = arith.negf %29 : vector<8x128xf32>
    %31 = math.exp %30 : vector<8x128xf32>
    %cst_17 = arith.constant 1.000000e+00 : f32
    %32 = vector.broadcast %cst_17 : f32 to vector<8x128xf32>
    %33 = arith.addf %32, %31 : vector<8x128xf32>
    %34 = arith.divf %32, %33 : vector<8x128xf32>
    %35 = vector.extract_strided_slice %22 {offsets = [0, 256], sizes = [8, 128], strides = [1, 1]} : vector<8x512xf32> to vector<8x128xf32>
    %36 = math.tanh %35 : vector<8x128xf32>
    %37 = vector.extract_strided_slice %22 {offsets = [0, 384], sizes = [8, 128], strides = [1, 1]} : vector<8x512xf32> to vector<8x128xf32>
    %38 = arith.negf %37 : vector<8x128xf32>
    %39 = math.exp %38 : vector<8x128xf32>
    %cst_18 = arith.constant 1.000000e+00 : f32
    %40 = vector.broadcast %cst_18 : f32 to vector<8x128xf32>
    %41 = arith.addf %40, %39 : vector<8x128xf32>
    %42 = arith.divf %40, %41 : vector<8x128xf32>
    %43 = arith.mulf %34, %12 : vector<8x128xf32>
    %44 = arith.mulf %28, %36 : vector<8x128xf32>
    %45 = arith.addf %43, %44 : vector<8x128xf32>
    %46 = math.tanh %45 : vector<8x128xf32>
    %47 = arith.mulf %42, %46 : vector<8x128xf32>
    %c0_19 = arith.constant 0 : index
    %c0_20 = arith.constant 0 : index
    %c0_21 = arith.constant 0 : index
    %48 = vector.load %arg9[%c0_19, %c0_20, %c0_21] : memref<6x8x128xf32, #tpu.memory_space<vmem>>, vector<1x8x128xf32>
    %49 = vector.shape_cast %48 : vector<1x8x128xf32> to vector<8x128xf32>
    %50 = vector.shape_cast %47 : vector<8x128xf32> to vector<1x8x128xf32>
    tpu.vector_store %arg9[%c0_19, %c0_20, %c0_21], %50 {strides = array<i32>} : memref<6x8x128xf32, #tpu.memory_space<vmem>>, vector<1x8x128xf32>,
    %c3_22 = arith.constant 3 : index
    %c0_23 = arith.constant 0 : index
    %c0_24 = arith.constant 0 : index
    %51 = vector.load %arg9[%c3_22, %c0_23, %c0_24] : memref<6x8x128xf32, #tpu.memory_space<vmem>>, vector<1x8x128xf32>
    %52 = vector.shape_cast %51 : vector<1x8x128xf32> to vector<8x128xf32>
    %53 = vector.shape_cast %45 : vector<8x128xf32> to vector<1x8x128xf32>
    tpu.vector_store %arg9[%c3_22, %c0_23, %c0_24], %53 {strides = array<i32>} : memref<6x8x128xf32, #tpu.memory_space<vmem>>, vector<1x8x128xf32>,
    %c1 = arith.constant 1 : index
    %c0_25 = arith.constant 0 : index
    %c0_26 = arith.constant 0 : index
    %54 = vector.load %arg9[%c1, %c0_25, %c0_26] : memref<6x8x128xf32, #tpu.memory_space<vmem>>, vector<1x8x128xf32>
    %55 = vector.shape_cast %54 : vector<1x8x128xf32> to vector<8x128xf32>
    %56 = arith.mulf %55, %6 : vector<8x128xf32>
    %c4 = arith.constant 4 : index
    %c0_27 = arith.constant 0 : index
    %c0_28 = arith.constant 0 : index
    %57 = vector.load %arg9[%c4, %c0_27, %c0_28] : memref<6x8x128xf32, #tpu.memory_space<vmem>>, vector<1x8x128xf32>
    %58 = vector.shape_cast %57 : vector<1x8x128xf32> to vector<8x128xf32>
    %59 = arith.mulf %58, %6 : vector<8x128xf32>
    %60 = tpu.concatenate %47, %56 in 1 : vector<8x128xf32>, vector<8x128xf32> -> vector<8x256xf32>
    %61 = arith.truncf %60 : vector<8x256xf32> to vector<8x256xbf16>
    %c0_29 = arith.constant 0 : index
    %c0_30 = arith.constant 0 : index
    %c0_31 = arith.constant 0 : index
    %62 = vector.load %arg5[%c0_29, %c0_30, %c0_31] : memref<2x256x512xbf16, #tpu.memory_space<vmem>>, vector<1x256x512xbf16>
    %63 = vector.shape_cast %62 : vector<1x256x512xbf16> to vector<256x512xbf16>
    %cst_32 = arith.constant dense<0.000000e+00> : vector<8x512xf32>
    %64 = tpu.matmul %61, %63, %cst_32 {dimension_numbers = #tpu.dot_dimension_numbers<[1], [0], [0], [1], [0, 0, 1, 1], [], []>} : vector<8x256xbf16>, vector<256x512xbf16>, vector<8x512xf32> -> vector<8x512xf32>
    %c1_33 = arith.constant 1 : index
    %c0_34 = arith.constant 0 : index
    %c0_35 = arith.constant 0 : index
    %65 = vector.load %arg6[%c1_33, %c0_34, %c0_35] : memref<3x1x512xf32, #tpu.memory_space<vmem>>, vector<1x1x512xf32>
    %66 = vector.shape_cast %65 : vector<1x1x512xf32> to vector<1x512xf32>
    %67 = vector.broadcast %66 : vector<1x512xf32> to vector<8x512xf32>
    %68 = arith.addf %64, %67 : vector<8x512xf32>
    %69 = vector.extract_strided_slice %68 {offsets = [0, 0], sizes = [8, 128], strides = [1, 1]} : vector<8x512xf32> to vector<8x128xf32>
    %70 = arith.negf %69 : vector<8x128xf32>
    %71 = math.exp %70 : vector<8x128xf32>
    %cst_36 = arith.constant 1.000000e+00 : f32
    %72 = vector.broadcast %cst_36 : f32 to vector<8x128xf32>
    %73 = arith.addf %72, %71 : vector<8x128xf32>
    %74 = arith.divf %72, %73 : vector<8x128xf32>
    %75 = vector.extract_strided_slice %68 {offsets = [0, 128], sizes = [8, 128], strides = [1, 1]} : vector<8x512xf32> to vector<8x128xf32>
    %76 = arith.negf %75 : vector<8x128xf32>
    %77 = math.exp %76 : vector<8x128xf32>
    %cst_37 = arith.constant 1.000000e+00 : f32
    %78 = vector.broadcast %cst_37 : f32 to vector<8x128xf32>
    %79 = arith.addf %78, %77 : vector<8x128xf32>
    %80 = arith.divf %78, %79 : vector<8x128xf32>
    %81 = vector.extract_strided_slice %68 {offsets = [0, 256], sizes = [8, 128], strides = [1, 1]} : vector<8x512xf32> to vector<8x128xf32>
    %82 = math.tanh %81 : vector<8x128xf32>
    %83 = vector.extract_strided_slice %68 {offsets = [0, 384], sizes = [8, 128], strides = [1, 1]} : vector<8x512xf32> to vector<8x128xf32>
    %84 = arith.negf %83 : vector<8x128xf32>
    %85 = math.exp %84 : vector<8x128xf32>
    %cst_38 = arith.constant 1.000000e+00 : f32
    %86 = vector.broadcast %cst_38 : f32 to vector<8x128xf32>
    %87 = arith.addf %86, %85 : vector<8x128xf32>
    %88 = arith.divf %86, %87 : vector<8x128xf32>
    %89 = arith.mulf %80, %59 : vector<8x128xf32>
    %90 = arith.mulf %74, %82 : vector<8x128xf32>
    %91 = arith.addf %89, %90 : vector<8x128xf32>
    %92 = math.tanh %91 : vector<8x128xf32>
    %93 = arith.mulf %88, %92 : vector<8x128xf32>
    %c1_39 = arith.constant 1 : index
    %c0_40 = arith.constant 0 : index
    %c0_41 = arith.constant 0 : index
    %94 = vector.load %arg9[%c1_39, %c0_40, %c0_41] : memref<6x8x128xf32, #tpu.memory_space<vmem>>, vector<1x8x128xf32>
    %95 = vector.shape_cast %94 : vector<1x8x128xf32> to vector<8x128xf32>
    %96 = vector.shape_cast %93 : vector<8x128xf32> to vector<1x8x128xf32>
    tpu.vector_store %arg9[%c1_39, %c0_40, %c0_41], %96 {strides = array<i32>} : memref<6x8x128xf32, #tpu.memory_space<vmem>>, vector<1x8x128xf32>,
    %c4_42 = arith.constant 4 : index
    %c0_43 = arith.constant 0 : index
    %c0_44 = arith.constant 0 : index
    %97 = vector.load %arg9[%c4_42, %c0_43, %c0_44] : memref<6x8x128xf32, #tpu.memory_space<vmem>>, vector<1x8x128xf32>
    %98 = vector.shape_cast %97 : vector<1x8x128xf32> to vector<8x128xf32>
    %99 = vector.shape_cast %91 : vector<8x128xf32> to vector<1x8x128xf32>
    tpu.vector_store %arg9[%c4_42, %c0_43, %c0_44], %99 {strides = array<i32>} : memref<6x8x128xf32, #tpu.memory_space<vmem>>, vector<1x8x128xf32>,
    %c2 = arith.constant 2 : index
    %c0_45 = arith.constant 0 : index
    %c0_46 = arith.constant 0 : index
    %100 = vector.load %arg9[%c2, %c0_45, %c0_46] : memref<6x8x128xf32, #tpu.memory_space<vmem>>, vector<1x8x128xf32>
    %101 = vector.shape_cast %100 : vector<1x8x128xf32> to vector<8x128xf32>
    %102 = arith.mulf %101, %6 : vector<8x128xf32>
    %c5 = arith.constant 5 : index
    %c0_47 = arith.constant 0 : index
    %c0_48 = arith.constant 0 : index
    %103 = vector.load %arg9[%c5, %c0_47, %c0_48] : memref<6x8x128xf32, #tpu.memory_space<vmem>>, vector<1x8x128xf32>
    %104 = vector.shape_cast %103 : vector<1x8x128xf32> to vector<8x128xf32>
    %105 = arith.mulf %104, %6 : vector<8x128xf32>
    %106 = tpu.concatenate %93, %102 in 1 : vector<8x128xf32>, vector<8x128xf32> -> vector<8x256xf32>
    %107 = arith.truncf %106 : vector<8x256xf32> to vector<8x256xbf16>
    %c1_49 = arith.constant 1 : index
    %c0_50 = arith.constant 0 : index
    %c0_51 = arith.constant 0 : index
    %108 = vector.load %arg5[%c1_49, %c0_50, %c0_51] : memref<2x256x512xbf16, #tpu.memory_space<vmem>>, vector<1x256x512xbf16>
    %109 = vector.shape_cast %108 : vector<1x256x512xbf16> to vector<256x512xbf16>
    %cst_52 = arith.constant dense<0.000000e+00> : vector<8x512xf32>
    %110 = tpu.matmul %107, %109, %cst_52 {dimension_numbers = #tpu.dot_dimension_numbers<[1], [0], [0], [1], [0, 0, 1, 1], [], []>} : vector<8x256xbf16>, vector<256x512xbf16>, vector<8x512xf32> -> vector<8x512xf32>
    %c2_53 = arith.constant 2 : index
    %c0_54 = arith.constant 0 : index
    %c0_55 = arith.constant 0 : index
    %111 = vector.load %arg6[%c2_53, %c0_54, %c0_55] : memref<3x1x512xf32, #tpu.memory_space<vmem>>, vector<1x1x512xf32>
    %112 = vector.shape_cast %111 : vector<1x1x512xf32> to vector<1x512xf32>
    %113 = vector.broadcast %112 : vector<1x512xf32> to vector<8x512xf32>
    %114 = arith.addf %110, %113 : vector<8x512xf32>
    %115 = vector.extract_strided_slice %114 {offsets = [0, 0], sizes = [8, 128], strides = [1, 1]} : vector<8x512xf32> to vector<8x128xf32>
    %116 = arith.negf %115 : vector<8x128xf32>
    %117 = math.exp %116 : vector<8x128xf32>
    %cst_56 = arith.constant 1.000000e+00 : f32
    %118 = vector.broadcast %cst_56 : f32 to vector<8x128xf32>
    %119 = arith.addf %118, %117 : vector<8x128xf32>
    %120 = arith.divf %118, %119 : vector<8x128xf32>
    %121 = vector.extract_strided_slice %114 {offsets = [0, 128], sizes = [8, 128], strides = [1, 1]} : vector<8x512xf32> to vector<8x128xf32>
    %122 = arith.negf %121 : vector<8x128xf32>
    %123 = math.exp %122 : vector<8x128xf32>
    %cst_57 = arith.constant 1.000000e+00 : f32
    %124 = vector.broadcast %cst_57 : f32 to vector<8x128xf32>
    %125 = arith.addf %124, %123 : vector<8x128xf32>
    %126 = arith.divf %124, %125 : vector<8x128xf32>
    %127 = vector.extract_strided_slice %114 {offsets = [0, 256], sizes = [8, 128], strides = [1, 1]} : vector<8x512xf32> to vector<8x128xf32>
    %128 = math.tanh %127 : vector<8x128xf32>
    %129 = vector.extract_strided_slice %114 {offsets = [0, 384], sizes = [8, 128], strides = [1, 1]} : vector<8x512xf32> to vector<8x128xf32>
    %130 = arith.negf %129 : vector<8x128xf32>
    %131 = math.exp %130 : vector<8x128xf32>
    %cst_58 = arith.constant 1.000000e+00 : f32
    %132 = vector.broadcast %cst_58 : f32 to vector<8x128xf32>
    %133 = arith.addf %132, %131 : vector<8x128xf32>
    %134 = arith.divf %132, %133 : vector<8x128xf32>
    %135 = arith.mulf %126, %105 : vector<8x128xf32>
    %136 = arith.mulf %120, %128 : vector<8x128xf32>
    %137 = arith.addf %135, %136 : vector<8x128xf32>
    %138 = math.tanh %137 : vector<8x128xf32>
    %139 = arith.mulf %134, %138 : vector<8x128xf32>
    %c2_59 = arith.constant 2 : index
    %c0_60 = arith.constant 0 : index
    %c0_61 = arith.constant 0 : index
    %140 = vector.load %arg9[%c2_59, %c0_60, %c0_61] : memref<6x8x128xf32, #tpu.memory_space<vmem>>, vector<1x8x128xf32>
    %141 = vector.shape_cast %140 : vector<1x8x128xf32> to vector<8x128xf32>
    %142 = vector.shape_cast %139 : vector<8x128xf32> to vector<1x8x128xf32>
    tpu.vector_store %arg9[%c2_59, %c0_60, %c0_61], %142 {strides = array<i32>} : memref<6x8x128xf32, #tpu.memory_space<vmem>>, vector<1x8x128xf32>,
    %c5_62 = arith.constant 5 : index
    %c0_63 = arith.constant 0 : index
    %c0_64 = arith.constant 0 : index
    %143 = vector.load %arg9[%c5_62, %c0_63, %c0_64] : memref<6x8x128xf32, #tpu.memory_space<vmem>>, vector<1x8x128xf32>
    %144 = vector.shape_cast %143 : vector<1x8x128xf32> to vector<8x128xf32>
    %145 = vector.shape_cast %137 : vector<8x128xf32> to vector<1x8x128xf32>
    tpu.vector_store %arg9[%c5_62, %c0_63, %c0_64], %145 {strides = array<i32>} : memref<6x8x128xf32, #tpu.memory_space<vmem>>, vector<1x8x128xf32>,
    %c0_65 = arith.constant 0 : index
    %c0_66 = arith.constant 0 : index
    %c0_67 = arith.constant 0 : index
    %146 = vector.load %arg7[%c0_65, %c0_66, %c0_67] : memref<1x8x128xf32, #tpu.memory_space<vmem>>, vector<1x8x128xf32>
    %147 = vector.shape_cast %146 : vector<1x8x128xf32> to vector<8x128xf32>
    %148 = vector.shape_cast %139 : vector<8x128xf32> to vector<1x8x128xf32>
    tpu.vector_store %arg7[%c0_65, %c0_66, %c0_67], %148 {strides = array<i32>} : memref<1x8x128xf32, #tpu.memory_space<vmem>>, vector<1x8x128xf32>,
    %c0_i32_68 = arith.constant 0 : i32
    %149 = arith.cmpi eq, %arg0, %c0_i32_68 : i32
    %150 = arith.extui %149 : i1 to i32
    %c0_i32_69 = arith.constant 0 : i32
    %151 = arith.cmpi ne, %150, %c0_i32_69 : i32
    scf.if %151 {
      %c0_70 = arith.constant 0 : index
      %c0_71 = arith.constant 0 : index
      %c0_72 = arith.constant 0 : index
      %152 = vector.load %arg9[%c0_70, %c0_71, %c0_72] : memref<6x8x128xf32, #tpu.memory_space<vmem>>, vector<1x8x128xf32>
      %153 = vector.shape_cast %152 : vector<1x8x128xf32> to vector<8x128xf32>
      %c0_73 = arith.constant 0 : index
      %c0_74 = arith.constant 0 : index
      %c0_75 = arith.constant 0 : index
      %154 = vector.load %arg8[%c0_73, %c0_74, %c0_75] : memref<8x6x128xf32, #tpu.memory_space<vmem>>, vector<8x1x128xf32>
      %155 = vector.shape_cast %154 : vector<8x1x128xf32> to vector<8x128xf32>
      %156 = vector.shape_cast %153 : vector<8x128xf32> to vector<8x1x128xf32>
      tpu.vector_store %arg8[%c0_73, %c0_74, %c0_75], %156 {strides = array<i32>} : memref<8x6x128xf32, #tpu.memory_space<vmem>>, vector<8x1x128xf32>,
      %c1_76 = arith.constant 1 : index
      %c0_77 = arith.constant 0 : index
      %c0_78 = arith.constant 0 : index
      %157 = vector.load %arg9[%c1_76, %c0_77, %c0_78] : memref<6x8x128xf32, #tpu.memory_space<vmem>>, vector<1x8x128xf32>
      %158 = vector.shape_cast %157 : vector<1x8x128xf32> to vector<8x128xf32>
      %c0_79 = arith.constant 0 : index
      %c1_80 = arith.constant 1 : index
      %c0_81 = arith.constant 0 : index
      %159 = vector.load %arg8[%c0_79, %c1_80, %c0_81] : memref<8x6x128xf32, #tpu.memory_space<vmem>>, vector<8x1x128xf32>
      %160 = vector.shape_cast %159 : vector<8x1x128xf32> to vector<8x128xf32>
      %161 = vector.shape_cast %158 : vector<8x128xf32> to vector<8x1x128xf32>
      tpu.vector_store %arg8[%c0_79, %c1_80, %c0_81], %161 {strides = array<i32>} : memref<8x6x128xf32, #tpu.memory_space<vmem>>, vector<8x1x128xf32>,
      %c2_82 = arith.constant 2 : index
      %c0_83 = arith.constant 0 : index
      %c0_84 = arith.constant 0 : index
      %162 = vector.load %arg9[%c2_82, %c0_83, %c0_84] : memref<6x8x128xf32, #tpu.memory_space<vmem>>, vector<1x8x128xf32>
      %163 = vector.shape_cast %162 : vector<1x8x128xf32> to vector<8x128xf32>
      %c0_85 = arith.constant 0 : index
      %c2_86 = arith.constant 2 : index
      %c0_87 = arith.constant 0 : index
      %164 = vector.load %arg8[%c0_85, %c2_86, %c0_87] : memref<8x6x128xf32, #tpu.memory_space<vmem>>, vector<8x1x128xf32>
      %165 = vector.shape_cast %164 : vector<8x1x128xf32> to vector<8x128xf32>
      %166 = vector.shape_cast %163 : vector<8x128xf32> to vector<8x1x128xf32>
      tpu.vector_store %arg8[%c0_85, %c2_86, %c0_87], %166 {strides = array<i32>} : memref<8x6x128xf32, #tpu.memory_space<vmem>>, vector<8x1x128xf32>,
      %c3_88 = arith.constant 3 : index
      %c0_89 = arith.constant 0 : index
      %c0_90 = arith.constant 0 : index
      %167 = vector.load %arg9[%c3_88, %c0_89, %c0_90] : memref<6x8x128xf32, #tpu.memory_space<vmem>>, vector<1x8x128xf32>
      %168 = vector.shape_cast %167 : vector<1x8x128xf32> to vector<8x128xf32>
      %c0_91 = arith.constant 0 : index
      %c3_92 = arith.constant 3 : index
      %c0_93 = arith.constant 0 : index
      %169 = vector.load %arg8[%c0_91, %c3_92, %c0_93] : memref<8x6x128xf32, #tpu.memory_space<vmem>>, vector<8x1x128xf32>
      %170 = vector.shape_cast %169 : vector<8x1x128xf32> to vector<8x128xf32>
      %171 = vector.shape_cast %168 : vector<8x128xf32> to vector<8x1x128xf32>
      tpu.vector_store %arg8[%c0_91, %c3_92, %c0_93], %171 {strides = array<i32>} : memref<8x6x128xf32, #tpu.memory_space<vmem>>, vector<8x1x128xf32>,
      %c4_94 = arith.constant 4 : index
      %c0_95 = arith.constant 0 : index
      %c0_96 = arith.constant 0 : index
      %172 = vector.load %arg9[%c4_94, %c0_95, %c0_96] : memref<6x8x128xf32, #tpu.memory_space<vmem>>, vector<1x8x128xf32>
      %173 = vector.shape_cast %172 : vector<1x8x128xf32> to vector<8x128xf32>
      %c0_97 = arith.constant 0 : index
      %c4_98 = arith.constant 4 : index
      %c0_99 = arith.constant 0 : index
      %174 = vector.load %arg8[%c0_97, %c4_98, %c0_99] : memref<8x6x128xf32, #tpu.memory_space<vmem>>, vector<8x1x128xf32>
      %175 = vector.shape_cast %174 : vector<8x1x128xf32> to vector<8x128xf32>
      %176 = vector.shape_cast %173 : vector<8x128xf32> to vector<8x1x128xf32>
      tpu.vector_store %arg8[%c0_97, %c4_98, %c0_99], %176 {strides = array<i32>} : memref<8x6x128xf32, #tpu.memory_space<vmem>>, vector<8x1x128xf32>,
      %c5_100 = arith.constant 5 : index
      %c0_101 = arith.constant 0 : index
      %c0_102 = arith.constant 0 : index
      %177 = vector.load %arg9[%c5_100, %c0_101, %c0_102] : memref<6x8x128xf32, #tpu.memory_space<vmem>>, vector<1x8x128xf32>
      %178 = vector.shape_cast %177 : vector<1x8x128xf32> to vector<8x128xf32>
      %c0_103 = arith.constant 0 : index
      %c5_104 = arith.constant 5 : index
      %c0_105 = arith.constant 0 : index
      %179 = vector.load %arg8[%c0_103, %c5_104, %c0_105] : memref<8x6x128xf32, #tpu.memory_space<vmem>>, vector<8x1x128xf32>
      %180 = vector.shape_cast %179 : vector<8x1x128xf32> to vector<8x128xf32>
      %181 = vector.shape_cast %178 : vector<8x128xf32> to vector<8x1x128xf32>
      tpu.vector_store %arg8[%c0_103, %c5_104, %c0_105], %181 {strides = array<i32>} : memref<8x6x128xf32, #tpu.memory_space<vmem>>, vector<8x1x128xf32>,
    } else {
    }
    return
  }
  func.func @transform_0(%arg0: i32) -> (i32, i32, i32) {
    %c0_i32 = arith.constant 0 : i32
    %c0_i32_0 = arith.constant 0 : i32
    %c0_i32_1 = arith.constant 0 : i32
    return %arg0, %c0_i32, %c0_i32_0 : i32, i32, i32
  }
  func.func @transform_1(%arg0: i32) -> (i32, i32, i32) {
    %c0_i32 = arith.constant 0 : i32
    %c0_i32_0 = arith.constant 0 : i32
    %c0_i32_1 = arith.constant 0 : i32
    return %arg0, %c0_i32, %c0_i32_0 : i32, i32, i32
  }
  func.func @transform_2(%arg0: i32) -> (i32, i32, i32) {
    %c0_i32 = arith.constant 0 : i32
    %c0_i32_0 = arith.constant 0 : i32
    %c0_i32_1 = arith.constant 0 : i32
    %c0_i32_2 = arith.constant 0 : i32
    return %c0_i32, %c0_i32_0, %c0_i32_1 : i32, i32, i32
  }
  func.func @transform_3(%arg0: i32) -> (i32, i32) {
    %c0_i32 = arith.constant 0 : i32
    %c0_i32_0 = arith.constant 0 : i32
    %c0_i32_1 = arith.constant 0 : i32
    return %c0_i32, %c0_i32_0 : i32, i32
  }
  func.func @transform_4(%arg0: i32) -> (i32, i32, i32) {
    %c0_i32 = arith.constant 0 : i32
    %c0_i32_0 = arith.constant 0 : i32
    %c0_i32_1 = arith.constant 0 : i32
    %c0_i32_2 = arith.constant 0 : i32
    return %c0_i32, %c0_i32_0, %c0_i32_1 : i32, i32, i32
  }
  func.func @transform_5(%arg0: i32) -> (i32, i32, i32) {
    %c0_i32 = arith.constant 0 : i32
    %c0_i32_0 = arith.constant 0 : i32
    %c0_i32_1 = arith.constant 0 : i32
    %c0_i32_2 = arith.constant 0 : i32
    return %c0_i32, %c0_i32_0, %c0_i32_1 : i32, i32, i32
  }
  func.func @transform_6(%arg0: i32) -> (i32, i32, i32) {
    %c0_i32 = arith.constant 0 : i32
    %c0_i32_0 = arith.constant 0 : i32
    %c0_i32_1 = arith.constant 0 : i32
    return %arg0, %c0_i32, %c0_i32_0 : i32, i32, i32
  }
  func.func @transform_7(%arg0: i32) -> (i32, i32, i32) {
    %c0_i32 = arith.constant 0 : i32
    %c0_i32_0 = arith.constant 0 : i32
    %c0_i32_1 = arith.constant 0 : i32
    %c0_i32_2 = arith.constant 0 : i32
    return %c0_i32, %c0_i32_0, %c0_i32_1 : i32, i32, i32
  }
}

</mosaic_0001>

<llo_original>
// kernel: lstm_net_forward.1
$region0: #{lstm_net_forward.1}
  #allocation0 [shape = 'u32[]', space=smem, size = 0x4, offset = 0x4, fixed_abs, tag = 'smem constant byte address 0x4 - core index']
  #allocation1 [shape = 'u32[144,128]{1,0:T(1,128)}', space=vmem, size = 0x12000, scoped, tag = 'internal scratch']
  #allocation2 [shape = 'f32[6,8,128]{2,1,0:T(8,128)}', space=vmem, size = 0x6000, scoped, tag = 'scratch operand']
  %s0 = inlined_call_operand.vmem [shape: f32[1,8,512], index: 0, kind: input, shape index: {}]
  %s1 = inlined_call_operand.vmem [shape: f32[1,8,1], index: 1, kind: input, shape index: {}]
  %s2 = inlined_call_operand.vmem [shape: f32[8,6,128], index: 2, kind: input, shape index: {}]
  %s3 = inlined_call_operand.vmem [shape: bf16[128,512], index: 3, kind: input, shape index: {}]
  %s4 = inlined_call_operand.hbm [shape: bf16[2,256,512], index: 4, kind: input, shape index: {}]
  %s5 = inlined_call_operand.vmem [shape: f32[3,1,512], index: 5, kind: input, shape index: {}]
  %s6 = inlined_call_operand.hbm [shape: f32[1,8,128], index: 6, kind: output, shape index: {0}]
  %s7 = inlined_call_operand.vmem [shape: f32[8,6,128], index: 7, kind: output, shape index: {1}]
  %8 = xla_tuple %s6, %s7
  %s9 = sld [smem:[#allocation0]]
  $region54: #{lstm_net_forward.1} parent=0
    _
  %s11 = ssub.s32 1, %s9
  %s12 = scalar_select 0, %s11, %s9
  $region1: #{lstm_net_forward.1} parent=0
    #allocation3 [shape = 'u8[524288]{0}', space=vmem, size = 0x80000, scoped, tag = 'input window, operand 4, single buffered']
    #allocation4 [shape = 's32[1]{0}', space=sflag, size = 0x4, scoped, tag = 'scoped memory for lstm_net_forward.1']
    #allocation5 [shape = 's32[1]{0}', space=sflag, size = 0x4, scoped, tag = 'scoped memory for lstm_net_forward.1']
    #allocation6 [shape = 'u8[4096]{0}', space=vmem, size = 0x1000, scoped, tag = 'output window, operand 0, single buffered']
    %13 = vsyncpa [#allocation4], 0
    %14 = vsyncpa [#allocation5], 0
    // Predicated region
    $region2: #{lstm_net_forward.1} parent=1 // pred_check
      _
    $region3: #{lstm_net_forward.1} parent=1 // pred_check_branch
      %16 = sbr.rel (0) target = $region5
    $region4: #{lstm_net_forward.1} parent=1 // pred_region
      _
    $region5: #{lstm_net_forward.1} parent=1 // pred_fallthru
      _
    // Predicated region
    $region6: #{lstm_net_forward.1} parent=1 // pred_check
      _
    $region7: #{lstm_net_forward.1} parent=1 // pred_check_branch
      %18 = sbr.rel (0) target = $region9
    $region8: #{lstm_net_forward.1} parent=1 // pred_region
      _
    $region9: #{lstm_net_forward.1} parent=1 // pred_fallthru
      _
    // Predicated region
    $region10: #{lstm_net_forward.1} parent=1 // pred_check
      _
    $region11: #{lstm_net_forward.1} parent=1 // pred_check_branch
      %20 = sbr.rel (0) target = $region13
    $region12: #{lstm_net_forward.1} parent=1 // pred_region
      _
    $region13: #{lstm_net_forward.1} parent=1 // pred_fallthru
      _
    // Predicated region
    $region14: #{lstm_net_forward.1} parent=1 // pred_check
      _
    $region15: #{lstm_net_forward.1} parent=1 // pred_check_branch
      %22 = sbr.rel (0) target = $region17
    $region16: #{lstm_net_forward.1} parent=1 // pred_region
      _
    $region17: #{lstm_net_forward.1} parent=1 // pred_fallthru
      _
    // Predicated region
    $region18: #{lstm_net_forward.1} parent=1 // pred_check
      _
    $region19: #{lstm_net_forward.1} parent=1 // pred_check_branch
      %24 = sbr.rel (0) target = $region21
    $region20: #{lstm_net_forward.1} parent=1 // pred_region
      %s26 = ssub.s32 16384, 16384
      %27 = vsyncadd [#allocation4], %s26
      %s28 = sshll.u32 [#allocation3], 4
      %s29 = int_to_ptr.vmem [resolvable:$true] %s28
      %34 = dma.hbm_to_vmem [thread:$0]  %s4, 16384, %s29, [#allocation4], 256, 256, 16
    $region21: #{lstm_net_forward.1} parent=1 // pred_fallthru
      _
    // Predicated region
    $region22: #{lstm_net_forward.1} parent=1 // pred_check
      _
    $region23: #{lstm_net_forward.1} parent=1 // pred_check_branch
      %36 = sbr.rel (0) target = $region25
    $region24: #{lstm_net_forward.1} parent=1 // pred_region
      _
    $region25: #{lstm_net_forward.1} parent=1 // pred_fallthru
      _
    // Predicated region
    $region26: #{lstm_net_forward.1} parent=1 // pred_check
      _
    $region27: #{lstm_net_forward.1} parent=1 // pred_check_branch
      %38 = sbr.rel (0) target = $region29
    $region28: #{lstm_net_forward.1} parent=1 // pred_region
      %39 = dma.done [#allocation4], 16384
    $region29: #{lstm_net_forward.1} parent=1 // pred_fallthru
      _
    %p41 = scmp.eq.s32.totalorder 0, 0
    // Predicated region
    $region30: #{lstm_net_forward.1} parent=1 // pred_check
      %p42 = pneg %p41
    $region31: #{lstm_net_forward.1} parent=1 // pred_check_branch
      %44 = sbr.rel (%p42) target = $region33
    $region32: #{lstm_net_forward.1} parent=1 // pred_region
      %v45 = vld [vmem:[%s2] sm:$0x1]
      %v46 = vld [vmem:[%s2 + $0x8] sm:$0x1]
      %v47 = vld [vmem:[%s2 + $0x10] sm:$0x1]
      %v48 = vld [vmem:[%s2 + $0x18] sm:$0x1]
      %v49 = vld [vmem:[%s2 + $0x20] sm:$0x1]
      %v50 = vld [vmem:[%s2 + $0x28] sm:$0x1]
      %v51 = vld [vmem:[%s2 + $0x30] sm:$0x1]
      %v52 = vld [vmem:[%s2 + $0x38] sm:$0x1]
      %v61 = vrot.slane %v46, 7
      %vm62 = vcmask 1041409
      %v63 = vsel %vm62, %v61, %v45
      %v64 = vrot.slane %v47, 6
      %vm65 = vcmask 1042434
      %v66 = vsel %vm65, %v64, %v63
      %v67 = vrot.slane %v48, 5
      %vm68 = vcmask 1043459
      %v69 = vsel %vm68, %v67, %v66
      %v70 = vrot.slane %v49, 4
      %vm71 = vcmask 1044484
      %v72 = vsel %vm71, %v70, %v69
      %v73 = vrot.slane %v50, 3
      %vm74 = vcmask 1045509
      %v75 = vsel %vm74, %v73, %v72
      %v76 = vrot.slane %v51, 2
      %vm77 = vcmask 1046534
      %v78 = vsel %vm77, %v76, %v75
      %v79 = vrot.slane %v52, 1
      %vm80 = vcmask 1047559
      %v81 = vsel %vm80, %v79, %v78
      %83 = vst [vmem:[#allocation2] sm:$0xff] %v81
      %v84 = vld [vmem:[%s2 + $0x1] sm:$0x1]
      %v85 = vld [vmem:[%s2 + $0x9] sm:$0x1]
      %v86 = vld [vmem:[%s2 + $0x11] sm:$0x1]
      %v87 = vld [vmem:[%s2 + $0x19] sm:$0x1]
      %v88 = vld [vmem:[%s2 + $0x21] sm:$0x1]
      %v89 = vld [vmem:[%s2 + $0x29] sm:$0x1]
      %v90 = vld [vmem:[%s2 + $0x31] sm:$0x1]
      %v91 = vld [vmem:[%s2 + $0x39] sm:$0x1]
      %v100 = vrot.slane %v85, 7
      %v101 = vsel %vm62, %v100, %v84
      %v102 = vrot.slane %v86, 6
      %v103 = vsel %vm65, %v102, %v101
      %v104 = vrot.slane %v87, 5
      %v105 = vsel %vm68, %v104, %v103
      %v106 = vrot.slane %v88, 4
      %v107 = vsel %vm71, %v106, %v105
      %v108 = vrot.slane %v89, 3
      %v109 = vsel %vm74, %v108, %v107
      %v110 = vrot.slane %v90, 2
      %v111 = vsel %vm77, %v110, %v109
      %v112 = vrot.slane %v91, 1
      %v113 = vsel %vm80, %v112, %v111
      %s115 = scalar_lea.vmem [#allocation2], 8
      %116 = vst [vmem:[%s115] sm:$0xff] %v113
      %v117 = vld [vmem:[%s2 + $0x2] sm:$0x1]
      %v118 = vld [vmem:[%s2 + $0xa] sm:$0x1]
      %v119 = vld [vmem:[%s2 + $0x12] sm:$0x1]
      %v120 = vld [vmem:[%s2 + $0x1a] sm:$0x1]
      %v121 = vld [vmem:[%s2 + $0x22] sm:$0x1]
      %v122 = vld [vmem:[%s2 + $0x2a] sm:$0x1]
      %v123 = vld [vmem:[%s2 + $0x32] sm:$0x1]
      %v124 = vld [vmem:[%s2 + $0x3a] sm:$0x1]
      %v133 = vrot.slane %v118, 7
      %v134 = vsel %vm62, %v133, %v117
      %v135 = vrot.slane %v119, 6
      %v136 = vsel %vm65, %v135, %v134
      %v137 = vrot.slane %v120, 5
      %v138 = vsel %vm68, %v137, %v136
      %v139 = vrot.slane %v121, 4
      %v140 = vsel %vm71, %v139, %v138
      %v141 = vrot.slane %v122, 3
      %v142 = vsel %vm74, %v141, %v140
      %v143 = vrot.slane %v123, 2
      %v144 = vsel %vm77, %v143, %v142
      %v145 = vrot.slane %v124, 1
      %v146 = vsel %vm80, %v145, %v144
      %s148 = scalar_lea.vmem [#allocation2], 16
      %149 = vst [vmem:[%s148] sm:$0xff] %v146
      %v150 = vld [vmem:[%s2 + $0x3] sm:$0x1]
      %v151 = vld [vmem:[%s2 + $0xb] sm:$0x1]
      %v152 = vld [vmem:[%s2 + $0x13] sm:$0x1]
      %v153 = vld [vmem:[%s2 + $0x1b] sm:$0x1]
      %v154 = vld [vmem:[%s2 + $0x23] sm:$0x1]
      %v155 = vld [vmem:[%s2 + $0x2b] sm:$0x1]
      %v156 = vld [vmem:[%s2 + $0x33] sm:$0x1]
      %v157 = vld [vmem:[%s2 + $0x3b] sm:$0x1]
      %v166 = vrot.slane %v151, 7
      %v167 = vsel %vm62, %v166, %v150
      %v168 = vrot.slane %v152, 6
      %v169 = vsel %vm65, %v168, %v167
      %v170 = vrot.slane %v153, 5
      %v171 = vsel %vm68, %v170, %v169
      %v172 = vrot.slane %v154, 4
      %v173 = vsel %vm71, %v172, %v171
      %v174 = vrot.slane %v155, 3
      %v175 = vsel %vm74, %v174, %v173
      %v176 = vrot.slane %v156, 2
      %v177 = vsel %vm77, %v176, %v175
      %v178 = vrot.slane %v157, 1
      %v179 = vsel %vm80, %v178, %v177
      %s181 = scalar_lea.vmem [#allocation2], 24
      %182 = vst [vmem:[%s181] sm:$0xff] %v179
      %v183 = vld [vmem:[%s2 + $0x4] sm:$0x1]
      %v184 = vld [vmem:[%s2 + $0xc] sm:$0x1]
      %v185 = vld [vmem:[%s2 + $0x14] sm:$0x1]
      %v186 = vld [vmem:[%s2 + $0x1c] sm:$0x1]
      %v187 = vld [vmem:[%s2 + $0x24] sm:$0x1]
      %v188 = vld [vmem:[%s2 + $0x2c] sm:$0x1]
      %v189 = vld [vmem:[%s2 + $0x34] sm:$0x1]
      %v190 = vld [vmem:[%s2 + $0x3c] sm:$0x1]
      %v199 = vrot.slane %v184, 7
      %v200 = vsel %vm62, %v199, %v183
      %v201 = vrot.slane %v185, 6
      %v202 = vsel %vm65, %v201, %v200
      %v203 = vrot.slane %v186, 5
      %v204 = vsel %vm68, %v203, %v202
      %v205 = vrot.slane %v187, 4
      %v206 = vsel %vm71, %v205, %v204
      %v207 = vrot.slane %v188, 3
      %v208 = vsel %vm74, %v207, %v206
      %v209 = vrot.slane %v189, 2
      %v210 = vsel %vm77, %v209, %v208
      %v211 = vrot.slane %v190, 1
      %v212 = vsel %vm80, %v211, %v210
      %s214 = scalar_lea.vmem [#allocation2], 32
      %215 = vst [vmem:[%s214] sm:$0xff] %v212
      %v216 = vld [vmem:[%s2 + $0x5] sm:$0x1]
      %v217 = vld [vmem:[%s2 + $0xd] sm:$0x1]
      %v218 = vld [vmem:[%s2 + $0x15] sm:$0x1]
      %v219 = vld [vmem:[%s2 + $0x1d] sm:$0x1]
      %v220 = vld [vmem:[%s2 + $0x25] sm:$0x1]
      %v221 = vld [vmem:[%s2 + $0x2d] sm:$0x1]
      %v222 = vld [vmem:[%s2 + $0x35] sm:$0x1]
      %v223 = vld [vmem:[%s2 + $0x3d] sm:$0x1]
      %v232 = vrot.slane %v217, 7
      %v233 = vsel %vm62, %v232, %v216
      %v234 = vrot.slane %v218, 6
      %v235 = vsel %vm65, %v234, %v233
      %v236 = vrot.slane %v219, 5
      %v237 = vsel %vm68, %v236, %v235
      %v238 = vrot.slane %v220, 4
      %v239 = vsel %vm71, %v238, %v237
      %v240 = vrot.slane %v221, 3
      %v241 = vsel %vm74, %v240, %v239
      %v242 = vrot.slane %v222, 2
      %v243 = vsel %vm77, %v242, %v241
      %v244 = vrot.slane %v223, 1
      %v245 = vsel %vm80, %v244, %v243
      %s247 = scalar_lea.vmem [#allocation2], 40
      %248 = vst [vmem:[%s247] sm:$0xff] %v245
    $region33: #{lstm_net_forward.1} parent=1 // pred_fallthru
      _
    %v249 = vld [vmem:[%s1] sm:$0xff]
    %251 = vset.pattern.permute.xlu0 0
    %252 = vperm.xlu0 %251, %v249
    %v253 = vpop.permute.xlu0 %252
    %v255 = vld [vmem:[#allocation2] sm:$0xff]
    %v256 = vmul.f32 %v255, %v253
    %s257 = scalar_lea.vmem [#allocation2], 24
    %v258 = vld [vmem:[%s257] sm:$0xff]
    %v259 = vmul.f32 %v258, %v253
    %v260 = vld [vmem:[%s0] sm:$0xff]
    %v261 = vld [vmem:[%s0 + $0x8] sm:$0xff]
    %v262 = vld [vmem:[%s0 + $0x10] sm:$0xff]
    %v263 = vld [vmem:[%s0 + $0x18] sm:$0xff]
    %v264 = vpack.c.bf16 %v256, %v256
    %v265 = vld [vmem:[%s3] sm:$0xff]
    %v266 = vld [vmem:[%s3 + $0x8] sm:$0xff]
    %v267 = vld [vmem:[%s3 + $0x10] sm:$0xff]
    %v268 = vld [vmem:[%s3 + $0x18] sm:$0xff]
    %v269 = vld [vmem:[%s3 + $0x20] sm:$0xff]
    %v270 = vld [vmem:[%s3 + $0x28] sm:$0xff]
    %v271 = vld [vmem:[%s3 + $0x30] sm:$0xff]
    %v272 = vld [vmem:[%s3 + $0x38] sm:$0xff]
    %v273 = vld [vmem:[%s3 + $0x40] sm:$0xff]
    %v274 = vld [vmem:[%s3 + $0x48] sm:$0xff]
    %v275 = vld [vmem:[%s3 + $0x50] sm:$0xff]
    %v276 = vld [vmem:[%s3 + $0x58] sm:$0xff]
    %v277 = vld [vmem:[%s3 + $0x60] sm:$0xff]
    %v278 = vld [vmem:[%s3 + $0x68] sm:$0xff]
    %v279 = vld [vmem:[%s3 + $0x70] sm:$0xff]
    %v280 = vld [vmem:[%s3 + $0x78] sm:$0xff]
    %v281 = vld [vmem:[%s3 + $0x80] sm:$0xff]
    %v282 = vld [vmem:[%s3 + $0x88] sm:$0xff]
    %v283 = vld [vmem:[%s3 + $0x90] sm:$0xff]
    %v284 = vld [vmem:[%s3 + $0x98] sm:$0xff]
    %v285 = vld [vmem:[%s3 + $0xa0] sm:$0xff]
    %v286 = vld [vmem:[%s3 + $0xa8] sm:$0xff]
    %v287 = vld [vmem:[%s3 + $0xb0] sm:$0xff]
    %v288 = vld [vmem:[%s3 + $0xb8] sm:$0xff]
    %v289 = vld [vmem:[%s3 + $0xc0] sm:$0xff]
    %v290 = vld [vmem:[%s3 + $0xc8] sm:$0xff]
    %v291 = vld [vmem:[%s3 + $0xd0] sm:$0xff]
    %v292 = vld [vmem:[%s3 + $0xd8] sm:$0xff]
    %v293 = vld [vmem:[%s3 + $0xe0] sm:$0xff]
    %v294 = vld [vmem:[%s3 + $0xe8] sm:$0xff]
    %v295 = vld [vmem:[%s3 + $0xf0] sm:$0xff]
    %v296 = vld [vmem:[%s3 + $0xf8] sm:$0xff]
    %v329 = vunpack.c.l.b16 %v265
    %v330 = vunpack.c.h.b16 %v265
    %v331 = vunpack.c.l.b16 %v266
    %v332 = vunpack.c.h.b16 %v266
    %v333 = vunpack.c.l.b16 %v267
    %v334 = vunpack.c.h.b16 %v267
    %v335 = vunpack.c.l.b16 %v268
    %v336 = vunpack.c.h.b16 %v268
    %v337 = vunpack.c.l.b16 %v269
    %v338 = vunpack.c.h.b16 %v269
    %v339 = vunpack.c.l.b16 %v270
    %v340 = vunpack.c.h.b16 %v270
    %v341 = vunpack.c.l.b16 %v271
    %v342 = vunpack.c.h.b16 %v271
    %v343 = vunpack.c.l.b16 %v272
    %v344 = vunpack.c.h.b16 %v272
    %v345 = vunpack.c.l.b16 %v273
    %v346 = vunpack.c.h.b16 %v273
    %v347 = vunpack.c.l.b16 %v274
    %v348 = vunpack.c.h.b16 %v274
    %v349 = vunpack.c.l.b16 %v275
    %v350 = vunpack.c.h.b16 %v275
    %v351 = vunpack.c.l.b16 %v276
    %v352 = vunpack.c.h.b16 %v276
    %v353 = vunpack.c.l.b16 %v277
    %v354 = vunpack.c.h.b16 %v277
    %v355 = vunpack.c.l.b16 %v278
    %v356 = vunpack.c.h.b16 %v278
    %v357 = vunpack.c.l.b16 %v279
    %v358 = vunpack.c.h.b16 %v279
    %v359 = vunpack.c.l.b16 %v280
    %v360 = vunpack.c.h.b16 %v280
    %v361 = vunpack.c.l.b16 %v281
    %v362 = vunpack.c.h.b16 %v281
    %v363 = vunpack.c.l.b16 %v282
    %v364 = vunpack.c.h.b16 %v282
    %v365 = vunpack.c.l.b16 %v283
    %v366 = vunpack.c.h.b16 %v283
    %v367 = vunpack.c.l.b16 %v284
    %v368 = vunpack.c.h.b16 %v284
    %v369 = vunpack.c.l.b16 %v285
    %v370 = vunpack.c.h.b16 %v285
    %v371 = vunpack.c.l.b16 %v286
    %v372 = vunpack.c.h.b16 %v286
    %v373 = vunpack.c.l.b16 %v287
    %v374 = vunpack.c.h.b16 %v287
    %v375 = vunpack.c.l.b16 %v288
    %v376 = vunpack.c.h.b16 %v288
    %v377 = vunpack.c.l.b16 %v289
    %v378 = vunpack.c.h.b16 %v289
    %v379 = vunpack.c.l.b16 %v290
    %v380 = vunpack.c.h.b16 %v290
    %v381 = vunpack.c.l.b16 %v291
    %v382 = vunpack.c.h.b16 %v291
    %v383 = vunpack.c.l.b16 %v292
    %v384 = vunpack.c.h.b16 %v292
    %v385 = vunpack.c.l.b16 %v293
    %v386 = vunpack.c.h.b16 %v293
    %v387 = vunpack.c.l.b16 %v294
    %v388 = vunpack.c.h.b16 %v294
    %v389 = vunpack.c.l.b16 %v295
    %v390 = vunpack.c.h.b16 %v295
    %v391 = vunpack.c.l.b16 %v296
    %v392 = vunpack.c.h.b16 %v296
    %v393 = vpack.c.b16 %v333, %v329
    %v394 = vpack.c.b16 %v334, %v330
    %v395 = vpack.c.b16 %v335, %v331
    %v396 = vpack.c.b16 %v336, %v332
    %v397 = vpack.c.b16 %v341, %v337
    %v398 = vpack.c.b16 %v342, %v338
    %v399 = vpack.c.b16 %v343, %v339
    %v400 = vpack.c.b16 %v344, %v340
    %v401 = vpack.c.b16 %v349, %v345
    %v402 = vpack.c.b16 %v350, %v346
    %v403 = vpack.c.b16 %v351, %v347
    %v404 = vpack.c.b16 %v352, %v348
    %v405 = vpack.c.b16 %v357, %v353
    %v406 = vpack.c.b16 %v358, %v354
    %v407 = vpack.c.b16 %v359, %v355
    %v408 = vpack.c.b16 %v360, %v356
    %v409 = vpack.c.b16 %v365, %v361
    %v410 = vpack.c.b16 %v366, %v362
    %v411 = vpack.c.b16 %v367, %v363
    %v412 = vpack.c.b16 %v368, %v364
    %v413 = vpack.c.b16 %v373, %v369
    %v414 = vpack.c.b16 %v374, %v370
    %v415 = vpack.c.b16 %v375, %v371
    %v416 = vpack.c.b16 %v376, %v372
    %v417 = vpack.c.b16 %v381, %v377
    %v418 = vpack.c.b16 %v382, %v378
    %v419 = vpack.c.b16 %v383, %v379
    %v420 = vpack.c.b16 %v384, %v380
    %v421 = vpack.c.b16 %v389, %v385
    %v422 = vpack.c.b16 %v390, %v386
    %v423 = vpack.c.b16 %v391, %v387
    %v424 = vpack.c.b16 %v392, %v388
    %457 = vmatprep.subr.bf16.mxu0 %v422
    %458 = vmatpush1.bf16.msra.mxu0 %v421
    %459 = vmatprep.subr.bf16.mxu0 %v418
    %460 = vmatpush1.bf16.msra.mxu0 %v417
    %461 = vmatprep.subr.bf16.mxu0 %v414
    %462 = vmatpush1.bf16.msra.mxu0 %v413
    %463 = vmatprep.subr.bf16.mxu0 %v410
    %464 = vmatpush1.bf16.msra.mxu0 %v409
    %465 = vmatprep.subr.bf16.mxu0 %v406
    %466 = vmatpush1.bf16.msra.mxu0 %v405
    %467 = vmatprep.subr.bf16.mxu0 %v402
    %468 = vmatpush1.bf16.msra.mxu0 %v401
    %469 = vmatprep.subr.bf16.mxu0 %v398
    %470 = vmatpush1.bf16.msra.mxu0 %v397
    %471 = vmatprep.subr.bf16.mxu0 %v394
    %472 = vmatpush1.bf16.msra.mxu0 %v393
    %473 = vmatprep.subr.bf16.mxu0 0
    %474 = vmatpush2.bf16.msra.mxu0 0
    %475 = vmatprep.subr.bf16.mxu0 0
    %476 = vmatpush2.bf16.msra.mxu0 0
    %477 = vmatprep.subr.bf16.mxu0 0
    %478 = vmatpush2.bf16.msra.mxu0 0
    %479 = vmatprep.subr.bf16.mxu0 0
    %480 = vmatpush2.bf16.msra.mxu0 0
    %481 = vmatprep.subr.bf16.mxu0 0
    %482 = vmatpush2.bf16.msra.mxu0 0
    %483 = vmatprep.subr.bf16.mxu0 0
    %484 = vmatpush2.bf16.msra.mxu0 0
    %485 = vmatprep.subr.bf16.mxu0 0
    %486 = vmatpush2.bf16.msra.mxu0 0
    %487 = vmatprep.subr.bf16.mxu0 0
    %488 = vmatpush2.bf16.msra.mxu0 0
    %489 = vmatprep.mubr.bf16.mxu0 0
    %490 = vmatmul.mubr.bf16.gmra.mxu0 %v264
    %v491 = vpop.f32.mrf.mxu0
    %v492 = vadd.f32 0.0, %v491
    %v493 = vpop.f32.mrf.mxu0
    %v494 = vadd.f32 0.0, %v493
    %v495 = vpop.f32.mrf.mxu0
    %v496 = vpop.f32.mrf.mxu0
    %497 = vdwg.mxu0
    %498 = vmatprep.subr.bf16.mxu0 %v424
    %499 = vmatpush1.bf16.msra.mxu0 %v423
    %500 = vmatprep.subr.bf16.mxu0 %v420
    %501 = vmatpush1.bf16.msra.mxu0 %v419
    %502 = vmatprep.subr.bf16.mxu0 %v416
    %503 = vmatpush1.bf16.msra.mxu0 %v415
    %504 = vmatprep.subr.bf16.mxu0 %v412
    %505 = vmatpush1.bf16.msra.mxu0 %v411
    %506 = vmatprep.subr.bf16.mxu0 %v408
    %507 = vmatpush1.bf16.msra.mxu0 %v407
    %508 = vmatprep.subr.bf16.mxu0 %v404
    %509 = vmatpush1.bf16.msra.mxu0 %v403
    %510 = vmatprep.subr.bf16.mxu0 %v400
    %511 = vmatpush1.bf16.msra.mxu0 %v399
    %512 = vmatprep.subr.bf16.mxu0 %v396
    %513 = vmatpush1.bf16.msra.mxu0 %v395
    %514 = vmatprep.subr.bf16.mxu0 0
    %515 = vmatpush2.bf16.msra.mxu0 0
    %516 = vmatprep.subr.bf16.mxu0 0
    %517 = vmatpush2.bf16.msra.mxu0 0
    %518 = vmatprep.subr.bf16.mxu0 0
    %519 = vmatpush2.bf16.msra.mxu0 0
    %520 = vmatprep.subr.bf16.mxu0 0
    %521 = vmatpush2.bf16.msra.mxu0 0
    %522 = vmatprep.subr.bf16.mxu0 0
    %523 = vmatpush2.bf16.msra.mxu0 0
    %524 = vmatprep.subr.bf16.mxu0 0
    %525 = vmatpush2.bf16.msra.mxu0 0
    %526 = vmatprep.subr.bf16.mxu0 0
    %527 = vmatpush2.bf16.msra.mxu0 0
    %528 = vmatprep.subr.bf16.mxu0 0
    %529 = vmatpush2.bf16.msra.mxu0 0
    %530 = vmatprep.mubr.bf16.mxu0 0
    %531 = vmatmul.mubr.bf16.gmra.mxu0 %v264
    %v532 = vpop.f32.mrf.mxu0
    %v533 = vadd.f32 0.0, %v532
    %v534 = vpop.f32.mrf.mxu0
    %v535 = vadd.f32 0.0, %v534
    %v536 = vpop.f32.mrf.mxu0
    %v537 = vpop.f32.mrf.mxu0
    %538 = vdwg.mxu0
    %v539 = vadd.f32 %v260, %v492
    %v540 = vadd.f32 %v261, %v494
    %v541 = vadd.f32 %v262, %v533
    %v542 = vadd.f32 %v263, %v535
    %v543 = vld [vmem:[%s5] sm:$0xf]
    %v545 = vlaneseq
    %v546 = vshrl.u32 %v545, 7
    %v547 = vsub.s32 0, %v546
    %v548 = vrot.slane %v543, %v547
    %v549 = vlaneseq
    %v550 = vshrl.u32 %v549, 7
    %v551 = vsub.s32 1, %v550
    %v552 = vrot.slane %v543, %v551
    %v553 = vlaneseq
    %v554 = vshrl.u32 %v553, 7
    %v555 = vsub.s32 2, %v554
    %v556 = vrot.slane %v543, %v555
    %v557 = vlaneseq
    %v558 = vshrl.u32 %v557, 7
    %v559 = vsub.s32 3, %v558
    %v560 = vrot.slane %v543, %v559
    %v565 = vadd.f32 %v539, %v548
    %v566 = vadd.f32 %v540, %v552
    %v567 = vadd.f32 %v541, %v556
    %v568 = vadd.f32 %v542, %v560
    %v569 = vxor.u32 %v565, 2147483648
    %v570 = vmul.f32 %v569, 1.442695
    %v571 = vpow.pop %v570
    %v572 = vadd.f32 %v571, 1.0
    %v573 = vrcp.pop %v572
    %v574 = vmul.f32 1.0, %v573
    %v575 = vxor.u32 %v566, 2147483648
    %v576 = vmul.f32 %v575, 1.442695
    %v577 = vpow.pop %v576
    %v578 = vadd.f32 %v577, 1.0
    %v579 = vrcp.pop %v578
    %v580 = vmul.f32 1.0, %v579
    %v581 = vtanh.pop %v567
    %v582 = vxor.u32 %v568, 2147483648
    %v583 = vmul.f32 %v582, 1.442695
    %v584 = vpow.pop %v583
    %v585 = vadd.f32 %v584, 1.0
    %v586 = vrcp.pop %v585
    %v587 = vmul.f32 1.0, %v586
    %v588 = vmul.f32 %v580, %v259
    %v589 = vmul.f32 %v574, %v581
    %v590 = vadd.f32 %v588, %v589
    %v591 = vtanh.pop %v590
    %v592 = vmul.f32 %v587, %v591
    %593 = vst [vmem:[#allocation2] sm:$0xff] %v592
    %594 = vst [vmem:[%s257] sm:$0xff] %v590
    %s595 = scalar_lea.vmem [#allocation2], 8
    %v596 = vld [vmem:[%s595] sm:$0xff]
    %v597 = vmul.f32 %v596, %v253
    %s598 = scalar_lea.vmem [#allocation2], 32
    %v599 = vld [vmem:[%s598] sm:$0xff]
    %v600 = vmul.f32 %v599, %v253
    %v601 = vpack.c.bf16 %v592, %v592
    %v602 = vpack.c.bf16 %v597, %v597
    %v603 = vld [vmem:[#allocation3] sm:$0xff]
    %v604 = vld [vmem:[#allocation3 + $0x8] sm:$0xff]
    %v605 = vld [vmem:[#allocation3 + $0x10] sm:$0xff]
    %v606 = vld [vmem:[#allocation3 + $0x18] sm:$0xff]
    %v607 = vld [vmem:[#allocation3 + $0x20] sm:$0xff]
    %v608 = vld [vmem:[#allocation3 + $0x28] sm:$0xff]
    %v609 = vld [vmem:[#allocation3 + $0x30] sm:$0xff]
    %v610 = vld [vmem:[#allocation3 + $0x38] sm:$0xff]
    %v611 = vld [vmem:[#allocation3 + $0x40] sm:$0xff]
    %v612 = vld [vmem:[#allocation3 + $0x48] sm:$0xff]
    %v613 = vld [vmem:[#allocation3 + $0x50] sm:$0xff]
    %v614 = vld [vmem:[#allocation3 + $0x58] sm:$0xff]
    %v615 = vld [vmem:[#allocation3 + $0x60] sm:$0xff]
    %v616 = vld [vmem:[#allocation3 + $0x68] sm:$0xff]
    %v617 = vld [vmem:[#allocation3 + $0x70] sm:$0xff]
    %v618 = vld [vmem:[#allocation3 + $0x78] sm:$0xff]
    %v619 = vld [vmem:[#allocation3 + $0x80] sm:$0xff]
    %v620 = vld [vmem:[#allocation3 + $0x88] sm:$0xff]
    %v621 = vld [vmem:[#allocation3 + $0x90] sm:$0xff]
    %v622 = vld [vmem:[#allocation3 + $0x98] sm:$0xff]
    %v623 = vld [vmem:[#allocation3 + $0xa0] sm:$0xff]
    %v624 = vld [vmem:[#allocation3 + $0xa8] sm:$0xff]
    %v625 = vld [vmem:[#allocation3 + $0xb0] sm:$0xff]
    %v626 = vld [vmem:[#allocation3 + $0xb8] sm:$0xff]
    %v627 = vld [vmem:[#allocation3 + $0xc0] sm:$0xff]
    %v628 = vld [vmem:[#allocation3 + $0xc8] sm:$0xff]
    %v629 = vld [vmem:[#allocation3 + $0xd0] sm:$0xff]
    %v630 = vld [vmem:[#allocation3 + $0xd8] sm:$0xff]
    %v631 = vld [vmem:[#allocation3 + $0xe0] sm:$0xff]
    %v632 = vld [vmem:[#allocation3 + $0xe8] sm:$0xff]
    %v633 = vld [vmem:[#allocation3 + $0xf0] sm:$0xff]
    %v634 = vld [vmem:[#allocation3 + $0xf8] sm:$0xff]
    %v635 = vld [vmem:[#allocation3 + $0x100] sm:$0xff]
    %v636 = vld [vmem:[#allocation3 + $0x108] sm:$0xff]
    %v637 = vld [vmem:[#allocation3 + $0x110] sm:$0xff]
    %v638 = vld [vmem:[#allocation3 + $0x118] sm:$0xff]
    %v639 = vld [vmem:[#allocation3 + $0x120] sm:$0xff]
    %v640 = vld [vmem:[#allocation3 + $0x128] sm:$0xff]
    %v641 = vld [vmem:[#allocation3 + $0x130] sm:$0xff]
    %v642 = vld [vmem:[#allocation3 + $0x138] sm:$0xff]
    %v643 = vld [vmem:[#allocation3 + $0x140] sm:$0xff]
    %v644 = vld [vmem:[#allocation3 + $0x148] sm:$0xff]
    %v645 = vld [vmem:[#allocation3 + $0x150] sm:$0xff]
    %v646 = vld [vmem:[#allocation3 + $0x158] sm:$0xff]
    %v647 = vld [vmem:[#allocation3 + $0x160] sm:$0xff]
    %v648 = vld [vmem:[#allocation3 + $0x168] sm:$0xff]
    %v649 = vld [vmem:[#allocation3 + $0x170] sm:$0xff]
    %v650 = vld [vmem:[#allocation3 + $0x178] sm:$0xff]
    %v651 = vld [vmem:[#allocation3 + $0x180] sm:$0xff]
    %v652 = vld [vmem:[#allocation3 + $0x188] sm:$0xff]
    %v653 = vld [vmem:[#allocation3 + $0x190] sm:$0xff]
    %v654 = vld [vmem:[#allocation3 + $0x198] sm:$0xff]
    %v655 = vld [vmem:[#allocation3 + $0x1a0] sm:$0xff]
    %v656 = vld [vmem:[#allocation3 + $0x1a8] sm:$0xff]
    %v657 = vld [vmem:[#allocation3 + $0x1b0] sm:$0xff]
    %v658 = vld [vmem:[#allocation3 + $0x1b8] sm:$0xff]
    %v659 = vld [vmem:[#allocation3 + $0x1c0] sm:$0xff]
    %v660 = vld [vmem:[#allocation3 + $0x1c8] sm:$0xff]
    %v661 = vld [vmem:[#allocation3 + $0x1d0] sm:$0xff]
    %v662 = vld [vmem:[#allocation3 + $0x1d8] sm:$0xff]
    %v663 = vld [vmem:[#allocation3 + $0x1e0] sm:$0xff]
    %v664 = vld [vmem:[#allocation3 + $0x1e8] sm:$0xff]
    %v665 = vld [vmem:[#allocation3 + $0x1f0] sm:$0xff]
    %v666 = vld [vmem:[#allocation3 + $0x1f8] sm:$0xff]
    %s667 = scalar_lea.vmem %s5, 4
    %v668 = vld [vmem:[%s667] sm:$0xf]
    %v670 = vlaneseq
    %v671 = vshrl.u32 %v670, 7
    %v672 = vsub.s32 0, %v671
    %v673 = vrot.slane %v668, %v672
    %v674 = vlaneseq
    %v675 = vshrl.u32 %v674, 7
    %v676 = vsub.s32 1, %v675
    %v677 = vrot.slane %v668, %v676
    %v678 = vlaneseq
    %v679 = vshrl.u32 %v678, 7
    %v680 = vsub.s32 2, %v679
    %v681 = vrot.slane %v668, %v680
    %v682 = vlaneseq
    %v683 = vshrl.u32 %v682, 7
    %v684 = vsub.s32 3, %v683
    %v685 = vrot.slane %v668, %v684
    %v754 = vunpack.c.l.b16 %v603
    %v755 = vunpack.c.h.b16 %v603
    %v756 = vunpack.c.l.b16 %v604
    %v757 = vunpack.c.h.b16 %v604
    %v758 = vunpack.c.l.b16 %v605
    %v759 = vunpack.c.h.b16 %v605
    %v760 = vunpack.c.l.b16 %v606
    %v761 = vunpack.c.h.b16 %v606
    %v762 = vunpack.c.l.b16 %v607
    %v763 = vunpack.c.h.b16 %v607
    %v764 = vunpack.c.l.b16 %v608
    %v765 = vunpack.c.h.b16 %v608
    %v766 = vunpack.c.l.b16 %v609
    %v767 = vunpack.c.h.b16 %v609
    %v768 = vunpack.c.l.b16 %v610
    %v769 = vunpack.c.h.b16 %v610
    %v770 = vunpack.c.l.b16 %v611
    %v771 = vunpack.c.h.b16 %v611
    %v772 = vunpack.c.l.b16 %v612
    %v773 = vunpack.c.h.b16 %v612
    %v774 = vunpack.c.l.b16 %v613
    %v775 = vunpack.c.h.b16 %v613
    %v776 = vunpack.c.l.b16 %v614
    %v777 = vunpack.c.h.b16 %v614
    %v778 = vunpack.c.l.b16 %v615
    %v779 = vunpack.c.h.b16 %v615
    %v780 = vunpack.c.l.b16 %v616
    %v781 = vunpack.c.h.b16 %v616
    %v782 = vunpack.c.l.b16 %v617
    %v783 = vunpack.c.h.b16 %v617
    %v784 = vunpack.c.l.b16 %v618
    %v785 = vunpack.c.h.b16 %v618
    %v786 = vunpack.c.l.b16 %v619
    %v787 = vunpack.c.h.b16 %v619
    %v788 = vunpack.c.l.b16 %v620
    %v789 = vunpack.c.h.b16 %v620
    %v790 = vunpack.c.l.b16 %v621
    %v791 = vunpack.c.h.b16 %v621
    %v792 = vunpack.c.l.b16 %v622
    %v793 = vunpack.c.h.b16 %v622
    %v794 = vunpack.c.l.b16 %v623
    %v795 = vunpack.c.h.b16 %v623
    %v796 = vunpack.c.l.b16 %v624
    %v797 = vunpack.c.h.b16 %v624
    %v798 = vunpack.c.l.b16 %v625
    %v799 = vunpack.c.h.b16 %v625
    %v800 = vunpack.c.l.b16 %v626
    %v801 = vunpack.c.h.b16 %v626
    %v802 = vunpack.c.l.b16 %v627
    %v803 = vunpack.c.h.b16 %v627
    %v804 = vunpack.c.l.b16 %v628
    %v805 = vunpack.c.h.b16 %v628
    %v806 = vunpack.c.l.b16 %v629
    %v807 = vunpack.c.h.b16 %v629
    %v808 = vunpack.c.l.b16 %v630
    %v809 = vunpack.c.h.b16 %v630
    %v810 = vunpack.c.l.b16 %v631
    %v811 = vunpack.c.h.b16 %v631
    %v812 = vunpack.c.l.b16 %v632
    %v813 = vunpack.c.h.b16 %v632
    %v814 = vunpack.c.l.b16 %v633
    %v815 = vunpack.c.h.b16 %v633
    %v816 = vunpack.c.l.b16 %v634
    %v817 = vunpack.c.h.b16 %v634
    %v818 = vunpack.c.l.b16 %v635
    %v819 = vunpack.c.h.b16 %v635
    %v820 = vunpack.c.l.b16 %v636
    %v821 = vunpack.c.h.b16 %v636
    %v822 = vunpack.c.l.b16 %v637
    %v823 = vunpack.c.h.b16 %v637
    %v824 = vunpack.c.l.b16 %v638
    %v825 = vunpack.c.h.b16 %v638
    %v826 = vunpack.c.l.b16 %v639
    %v827 = vunpack.c.h.b16 %v639
    %v828 = vunpack.c.l.b16 %v640
    %v829 = vunpack.c.h.b16 %v640
    %v830 = vunpack.c.l.b16 %v641
    %v831 = vunpack.c.h.b16 %v641
    %v832 = vunpack.c.l.b16 %v642
    %v833 = vunpack.c.h.b16 %v642
    %v834 = vunpack.c.l.b16 %v643
    %v835 = vunpack.c.h.b16 %v643
    %v836 = vunpack.c.l.b16 %v644
    %v837 = vunpack.c.h.b16 %v644
    %v838 = vunpack.c.l.b16 %v645
    %v839 = vunpack.c.h.b16 %v645
    %v840 = vunpack.c.l.b16 %v646
    %v841 = vunpack.c.h.b16 %v646
    %v842 = vunpack.c.l.b16 %v647
    %v843 = vunpack.c.h.b16 %v647
    %v844 = vunpack.c.l.b16 %v648
    %v845 = vunpack.c.h.b16 %v648
    %v846 = vunpack.c.l.b16 %v649
    %v847 = vunpack.c.h.b16 %v649
    %v848 = vunpack.c.l.b16 %v650
    %v849 = vunpack.c.h.b16 %v650
    %v850 = vunpack.c.l.b16 %v651
    %v851 = vunpack.c.h.b16 %v651
    %v852 = vunpack.c.l.b16 %v652
    %v853 = vunpack.c.h.b16 %v652
    %v854 = vunpack.c.l.b16 %v653
    %v855 = vunpack.c.h.b16 %v653
    %v856 = vunpack.c.l.b16 %v654
    %v857 = vunpack.c.h.b16 %v654
    %v858 = vunpack.c.l.b16 %v655
    %v859 = vunpack.c.h.b16 %v655
    %v860 = vunpack.c.l.b16 %v656
    %v861 = vunpack.c.h.b16 %v656
    %v862 = vunpack.c.l.b16 %v657
    %v863 = vunpack.c.h.b16 %v657
    %v864 = vunpack.c.l.b16 %v658
    %v865 = vunpack.c.h.b16 %v658
    %v866 = vunpack.c.l.b16 %v659
    %v867 = vunpack.c.h.b16 %v659
    %v868 = vunpack.c.l.b16 %v660
    %v869 = vunpack.c.h.b16 %v660
    %v870 = vunpack.c.l.b16 %v661
    %v871 = vunpack.c.h.b16 %v661
    %v872 = vunpack.c.l.b16 %v662
    %v873 = vunpack.c.h.b16 %v662
    %v874 = vunpack.c.l.b16 %v663
    %v875 = vunpack.c.h.b16 %v663
    %v876 = vunpack.c.l.b16 %v664
    %v877 = vunpack.c.h.b16 %v664
    %v878 = vunpack.c.l.b16 %v665
    %v879 = vunpack.c.h.b16 %v665
    %v880 = vunpack.c.l.b16 %v666
    %v881 = vunpack.c.h.b16 %v666
    %v882 = vpack.c.b16 %v758, %v754
    %v883 = vpack.c.b16 %v759, %v755
    %v884 = vpack.c.b16 %v760, %v756
    %v885 = vpack.c.b16 %v761, %v757
    %v886 = vpack.c.b16 %v766, %v762
    %v887 = vpack.c.b16 %v767, %v763
    %v888 = vpack.c.b16 %v768, %v764
    %v889 = vpack.c.b16 %v769, %v765
    %v890 = vpack.c.b16 %v774, %v770
    %v891 = vpack.c.b16 %v775, %v771
    %v892 = vpack.c.b16 %v776, %v772
    %v893 = vpack.c.b16 %v777, %v773
    %v894 = vpack.c.b16 %v782, %v778
    %v895 = vpack.c.b16 %v783, %v779
    %v896 = vpack.c.b16 %v784, %v780
    %v897 = vpack.c.b16 %v785, %v781
    %v898 = vpack.c.b16 %v790, %v786
    %v899 = vpack.c.b16 %v791, %v787
    %v900 = vpack.c.b16 %v792, %v788
    %v901 = vpack.c.b16 %v793, %v789
    %v902 = vpack.c.b16 %v798, %v794
    %v903 = vpack.c.b16 %v799, %v795
    %v904 = vpack.c.b16 %v800, %v796
    %v905 = vpack.c.b16 %v801, %v797
    %v906 = vpack.c.b16 %v806, %v802
    %v907 = vpack.c.b16 %v807, %v803
    %v908 = vpack.c.b16 %v808, %v804
    %v909 = vpack.c.b16 %v809, %v805
    %v910 = vpack.c.b16 %v814, %v810
    %v911 = vpack.c.b16 %v815, %v811
    %v912 = vpack.c.b16 %v816, %v812
    %v913 = vpack.c.b16 %v817, %v813
    %v914 = vpack.c.b16 %v822, %v818
    %v915 = vpack.c.b16 %v823, %v819
    %v916 = vpack.c.b16 %v824, %v820
    %v917 = vpack.c.b16 %v825, %v821
    %v918 = vpack.c.b16 %v830, %v826
    %v919 = vpack.c.b16 %v831, %v827
    %v920 = vpack.c.b16 %v832, %v828
    %v921 = vpack.c.b16 %v833, %v829
    %v922 = vpack.c.b16 %v838, %v834
    %v923 = vpack.c.b16 %v839, %v835
    %v924 = vpack.c.b16 %v840, %v836
    %v925 = vpack.c.b16 %v841, %v837
    %v926 = vpack.c.b16 %v846, %v842
    %v927 = vpack.c.b16 %v847, %v843
    %v928 = vpack.c.b16 %v848, %v844
    %v929 = vpack.c.b16 %v849, %v845
    %v930 = vpack.c.b16 %v854, %v850
    %v931 = vpack.c.b16 %v855, %v851
    %v932 = vpack.c.b16 %v856, %v852
    %v933 = vpack.c.b16 %v857, %v853
    %v934 = vpack.c.b16 %v862, %v858
    %v935 = vpack.c.b16 %v863, %v859
    %v936 = vpack.c.b16 %v864, %v860
    %v937 = vpack.c.b16 %v865, %v861
    %v938 = vpack.c.b16 %v870, %v866
    %v939 = vpack.c.b16 %v871, %v867
    %v940 = vpack.c.b16 %v872, %v868
    %v941 = vpack.c.b16 %v873, %v869
    %v942 = vpack.c.b16 %v878, %v874
    %v943 = vpack.c.b16 %v879, %v875
    %v944 = vpack.c.b16 %v880, %v876
    %v945 = vpack.c.b16 %v881, %v877
    %1010 = vmatprep.subr.bf16.mxu0 %v911
    %1011 = vmatpush1.bf16.msra.mxu0 %v910
    %1012 = vmatprep.subr.bf16.mxu0 %v907
    %1013 = vmatpush1.bf16.msra.mxu0 %v906
    %1014 = vmatprep.subr.bf16.mxu0 %v903
    %1015 = vmatpush1.bf16.msra.mxu0 %v902
    %1016 = vmatprep.subr.bf16.mxu0 %v899
    %1017 = vmatpush1.bf16.msra.mxu0 %v898
    %1018 = vmatprep.subr.bf16.mxu0 %v895
    %1019 = vmatpush1.bf16.msra.mxu0 %v894
    %1020 = vmatprep.subr.bf16.mxu0 %v891
    %1021 = vmatpush1.bf16.msra.mxu0 %v890
    %1022 = vmatprep.subr.bf16.mxu0 %v887
    %1023 = vmatpush1.bf16.msra.mxu0 %v886
    %1024 = vmatprep.subr.bf16.mxu0 %v883
    %1025 = vmatpush1.bf16.msra.mxu0 %v882
    %1026 = vmatprep.subr.bf16.mxu0 %v943
    %1027 = vmatpush2.bf16.msra.mxu0 %v942
    %1028 = vmatprep.subr.bf16.mxu0 %v939
    %1029 = vmatpush2.bf16.msra.mxu0 %v938
    %1030 = vmatprep.subr.bf16.mxu0 %v935
    %1031 = vmatpush2.bf16.msra.mxu0 %v934
    %1032 = vmatprep.subr.bf16.mxu0 %v931
    %1033 = vmatpush2.bf16.msra.mxu0 %v930
    %1034 = vmatprep.subr.bf16.mxu0 %v927
    %1035 = vmatpush2.bf16.msra.mxu0 %v926
    %1036 = vmatprep.subr.bf16.mxu0 %v923
    %1037 = vmatpush2.bf16.msra.mxu0 %v922
    %1038 = vmatprep.subr.bf16.mxu0 %v919
    %1039 = vmatpush2.bf16.msra.mxu0 %v918
    %1040 = vmatprep.subr.bf16.mxu0 %v915
    %1041 = vmatpush2.bf16.msra.mxu0 %v914
    %1042 = vmatprep.mubr.bf16.mxu0 %v602
    %1043 = vmatmul.mubr.bf16.gmra.mxu0 %v601
    %v1044 = vpop.f32.mrf.mxu0
    %v1045 = vadd.f32 %v673, %v1044
    %v1046 = vpop.f32.mrf.mxu0
    %v1047 = vadd.f32 %v677, %v1046
    %v1048 = vpop.f32.mrf.mxu0
    %v1049 = vpop.f32.mrf.mxu0
    %1050 = vdwg.mxu0
    %1051 = vmatprep.subr.bf16.mxu0 %v913
    %1052 = vmatpush1.bf16.msra.mxu0 %v912
    %1053 = vmatprep.subr.bf16.mxu0 %v909
    %1054 = vmatpush1.bf16.msra.mxu0 %v908
    %1055 = vmatprep.subr.bf16.mxu0 %v905
    %1056 = vmatpush1.bf16.msra.mxu0 %v904
    %1057 = vmatprep.subr.bf16.mxu0 %v901
    %1058 = vmatpush1.bf16.msra.mxu0 %v900
    %1059 = vmatprep.subr.bf16.mxu0 %v897
    %1060 = vmatpush1.bf16.msra.mxu0 %v896
    %1061 = vmatprep.subr.bf16.mxu0 %v893
    %1062 = vmatpush1.bf16.msra.mxu0 %v892
    %1063 = vmatprep.subr.bf16.mxu0 %v889
    %1064 = vmatpush1.bf16.msra.mxu0 %v888
    %1065 = vmatprep.subr.bf16.mxu0 %v885
    %1066 = vmatpush1.bf16.msra.mxu0 %v884
    %1067 = vmatprep.subr.bf16.mxu0 %v945
    %1068 = vmatpush2.bf16.msra.mxu0 %v944
    %1069 = vmatprep.subr.bf16.mxu0 %v941
    %1070 = vmatpush2.bf16.msra.mxu0 %v940
    %1071 = vmatprep.subr.bf16.mxu0 %v937
    %1072 = vmatpush2.bf16.msra.mxu0 %v936
    %1073 = vmatprep.subr.bf16.mxu0 %v933
    %1074 = vmatpush2.bf16.msra.mxu0 %v932
    %1075 = vmatprep.subr.bf16.mxu0 %v929
    %1076 = vmatpush2.bf16.msra.mxu0 %v928
    %1077 = vmatprep.subr.bf16.mxu0 %v925
    %1078 = vmatpush2.bf16.msra.mxu0 %v924
    %1079 = vmatprep.subr.bf16.mxu0 %v921
    %1080 = vmatpush2.bf16.msra.mxu0 %v920
    %1081 = vmatprep.subr.bf16.mxu0 %v917
    %1082 = vmatpush2.bf16.msra.mxu0 %v916
    %1083 = vmatprep.mubr.bf16.mxu0 %v602
    %1084 = vmatmul.mubr.bf16.gmra.mxu0 %v601
    %v1085 = vpop.f32.mrf.mxu0
    %v1086 = vadd.f32 %v681, %v1085
    %v1087 = vpop.f32.mrf.mxu0
    %v1088 = vadd.f32 %v685, %v1087
    %v1089 = vpop.f32.mrf.mxu0
    %v1090 = vpop.f32.mrf.mxu0
    %1091 = vdwg.mxu0
    %v1092 = vxor.u32 %v1045, 2147483648
    %v1093 = vmul.f32 %v1092, 1.442695
    %v1094 = vpow.pop %v1093
    %v1095 = vadd.f32 %v1094, 1.0
    %v1096 = vrcp.pop %v1095
    %v1097 = vmul.f32 1.0, %v1096
    %v1098 = vxor.u32 %v1047, 2147483648
    %v1099 = vmul.f32 %v1098, 1.442695
    %v1100 = vpow.pop %v1099
    %v1101 = vadd.f32 %v1100, 1.0
    %v1102 = vrcp.pop %v1101
    %v1103 = vmul.f32 1.0, %v1102
    %v1104 = vtanh.pop %v1086
    %v1105 = vxor.u32 %v1088, 2147483648
    %v1106 = vmul.f32 %v1105, 1.442695
    %v1107 = vpow.pop %v1106
    %v1108 = vadd.f32 %v1107, 1.0
    %v1109 = vrcp.pop %v1108
    %v1110 = vmul.f32 1.0, %v1109
    %v1111 = vmul.f32 %v1103, %v600
    %v1112 = vmul.f32 %v1097, %v1104
    %v1113 = vadd.f32 %v1111, %v1112
    %v1114 = vtanh.pop %v1113
    %v1115 = vmul.f32 %v1110, %v1114
    %1116 = vst [vmem:[%s595] sm:$0xff] %v1115
    %1117 = vst [vmem:[%s598] sm:$0xff] %v1113
    %s1118 = scalar_lea.vmem [#allocation2], 16
    %v1119 = vld [vmem:[%s1118] sm:$0xff]
    %v1120 = vmul.f32 %v1119, %v253
    %s1121 = scalar_lea.vmem [#allocation2], 40
    %v1122 = vld [vmem:[%s1121] sm:$0xff]
    %v1123 = vmul.f32 %v1122, %v253
    %v1124 = vpack.c.bf16 %v1115, %v1115
    %v1125 = vpack.c.bf16 %v1120, %v1120
    %s1126 = scalar_lea.vmem [#allocation3], 512
    %v1127 = vld [vmem:[%s1126] sm:$0xff]
    %v1128 = vld [vmem:[%s1126 + $0x8] sm:$0xff]
    %v1129 = vld [vmem:[%s1126 + $0x10] sm:$0xff]
    %v1130 = vld [vmem:[%s1126 + $0x18] sm:$0xff]
    %v1131 = vld [vmem:[%s1126 + $0x20] sm:$0xff]
    %v1132 = vld [vmem:[%s1126 + $0x28] sm:$0xff]
    %v1133 = vld [vmem:[%s1126 + $0x30] sm:$0xff]
    %v1134 = vld [vmem:[%s1126 + $0x38] sm:$0xff]
    %v1135 = vld [vmem:[%s1126 + $0x40] sm:$0xff]
    %v1136 = vld [vmem:[%s1126 + $0x48] sm:$0xff]
    %v1137 = vld [vmem:[%s1126 + $0x50] sm:$0xff]
    %v1138 = vld [vmem:[%s1126 + $0x58] sm:$0xff]
    %v1139 = vld [vmem:[%s1126 + $0x60] sm:$0xff]
    %v1140 = vld [vmem:[%s1126 + $0x68] sm:$0xff]
    %v1141 = vld [vmem:[%s1126 + $0x70] sm:$0xff]
    %v1142 = vld [vmem:[%s1126 + $0x78] sm:$0xff]
    %v1143 = vld [vmem:[%s1126 + $0x80] sm:$0xff]
    %v1144 = vld [vmem:[%s1126 + $0x88] sm:$0xff]
    %v1145 = vld [vmem:[%s1126 + $0x90] sm:$0xff]
    %v1146 = vld [vmem:[%s1126 + $0x98] sm:$0xff]
    %v1147 = vld [vmem:[%s1126 + $0xa0] sm:$0xff]
    %v1148 = vld [vmem:[%s1126 + $0xa8] sm:$0xff]
    %v1149 = vld [vmem:[%s1126 + $0xb0] sm:$0xff]
    %v1150 = vld [vmem:[%s1126 + $0xb8] sm:$0xff]
    %v1151 = vld [vmem:[%s1126 + $0xc0] sm:$0xff]
    %v1152 = vld [vmem:[%s1126 + $0xc8] sm:$0xff]
    %v1153 = vld [vmem:[%s1126 + $0xd0] sm:$0xff]
    %v1154 = vld [vmem:[%s1126 + $0xd8] sm:$0xff]
    %v1155 = vld [vmem:[%s1126 + $0xe0] sm:$0xff]
    %v1156 = vld [vmem:[%s1126 + $0xe8] sm:$0xff]
    %v1157 = vld [vmem:[%s1126 + $0xf0] sm:$0xff]
    %v1158 = vld [vmem:[%s1126 + $0xf8] sm:$0xff]
    %v1159 = vld [vmem:[%s1126 + $0x100] sm:$0xff]
    %v1160 = vld [vmem:[%s1126 + $0x108] sm:$0xff]
    %v1161 = vld [vmem:[%s1126 + $0x110] sm:$0xff]
    %v1162 = vld [vmem:[%s1126 + $0x118] sm:$0xff]
    %v1163 = vld [vmem:[%s1126 + $0x120] sm:$0xff]
    %v1164 = vld [vmem:[%s1126 + $0x128] sm:$0xff]
    %v1165 = vld [vmem:[%s1126 + $0x130] sm:$0xff]
    %v1166 = vld [vmem:[%s1126 + $0x138] sm:$0xff]
    %v1167 = vld [vmem:[%s1126 + $0x140] sm:$0xff]
    %v1168 = vld [vmem:[%s1126 + $0x148] sm:$0xff]
    %v1169 = vld [vmem:[%s1126 + $0x150] sm:$0xff]
    %v1170 = vld [vmem:[%s1126 + $0x158] sm:$0xff]
    %v1171 = vld [vmem:[%s1126 + $0x160] sm:$0xff]
    %v1172 = vld [vmem:[%s1126 + $0x168] sm:$0xff]
    %v1173 = vld [vmem:[%s1126 + $0x170] sm:$0xff]
    %v1174 = vld [vmem:[%s1126 + $0x178] sm:$0xff]
    %v1175 = vld [vmem:[%s1126 + $0x180] sm:$0xff]
    %v1176 = vld [vmem:[%s1126 + $0x188] sm:$0xff]
    %v1177 = vld [vmem:[%s1126 + $0x190] sm:$0xff]
    %v1178 = vld [vmem:[%s1126 + $0x198] sm:$0xff]
    %v1179 = vld [vmem:[%s1126 + $0x1a0] sm:$0xff]
    %v1180 = vld [vmem:[%s1126 + $0x1a8] sm:$0xff]
    %v1181 = vld [vmem:[%s1126 + $0x1b0] sm:$0xff]
    %v1182 = vld [vmem:[%s1126 + $0x1b8] sm:$0xff]
    %v1183 = vld [vmem:[%s1126 + $0x1c0] sm:$0xff]
    %v1184 = vld [vmem:[%s1126 + $0x1c8] sm:$0xff]
    %v1185 = vld [vmem:[%s1126 + $0x1d0] sm:$0xff]
    %v1186 = vld [vmem:[%s1126 + $0x1d8] sm:$0xff]
    %v1187 = vld [vmem:[%s1126 + $0x1e0] sm:$0xff]
    %v1188 = vld [vmem:[%s1126 + $0x1e8] sm:$0xff]
    %v1189 = vld [vmem:[%s1126 + $0x1f0] sm:$0xff]
    %v1190 = vld [vmem:[%s1126 + $0x1f8] sm:$0xff]
    %s1191 = scalar_lea.vmem %s5, 8
    %v1192 = vld [vmem:[%s1191] sm:$0xf]
    %v1194 = vlaneseq
    %v1195 = vshrl.u32 %v1194, 7
    %v1196 = vsub.s32 0, %v1195
    %v1197 = vrot.slane %v1192, %v1196
    %v1198 = vlaneseq
    %v1199 = vshrl.u32 %v1198, 7
    %v1200 = vsub.s32 1, %v1199
    %v1201 = vrot.slane %v1192, %v1200
    %v1202 = vlaneseq
    %v1203 = vshrl.u32 %v1202, 7
    %v1204 = vsub.s32 2, %v1203
    %v1205 = vrot.slane %v1192, %v1204
    %v1206 = vlaneseq
    %v1207 = vshrl.u32 %v1206, 7
    %v1208 = vsub.s32 3, %v1207
    %v1209 = vrot.slane %v1192, %v1208
    %v1278 = vunpack.c.l.b16 %v1127
    %v1279 = vunpack.c.h.b16 %v1127
    %v1280 = vunpack.c.l.b16 %v1128
    %v1281 = vunpack.c.h.b16 %v1128
    %v1282 = vunpack.c.l.b16 %v1129
    %v1283 = vunpack.c.h.b16 %v1129
    %v1284 = vunpack.c.l.b16 %v1130
    %v1285 = vunpack.c.h.b16 %v1130
    %v1286 = vunpack.c.l.b16 %v1131
    %v1287 = vunpack.c.h.b16 %v1131
    %v1288 = vunpack.c.l.b16 %v1132
    %v1289 = vunpack.c.h.b16 %v1132
    %v1290 = vunpack.c.l.b16 %v1133
    %v1291 = vunpack.c.h.b16 %v1133
    %v1292 = vunpack.c.l.b16 %v1134
    %v1293 = vunpack.c.h.b16 %v1134
    %v1294 = vunpack.c.l.b16 %v1135
    %v1295 = vunpack.c.h.b16 %v1135
    %v1296 = vunpack.c.l.b16 %v1136
    %v1297 = vunpack.c.h.b16 %v1136
    %v1298 = vunpack.c.l.b16 %v1137
    %v1299 = vunpack.c.h.b16 %v1137
    %v1300 = vunpack.c.l.b16 %v1138
    %v1301 = vunpack.c.h.b16 %v1138
    %v1302 = vunpack.c.l.b16 %v1139
    %v1303 = vunpack.c.h.b16 %v1139
    %v1304 = vunpack.c.l.b16 %v1140
    %v1305 = vunpack.c.h.b16 %v1140
    %v1306 = vunpack.c.l.b16 %v1141
    %v1307 = vunpack.c.h.b16 %v1141
    %v1308 = vunpack.c.l.b16 %v1142
    %v1309 = vunpack.c.h.b16 %v1142
    %v1310 = vunpack.c.l.b16 %v1143
    %v1311 = vunpack.c.h.b16 %v1143
    %v1312 = vunpack.c.l.b16 %v1144
    %v1313 = vunpack.c.h.b16 %v1144
    %v1314 = vunpack.c.l.b16 %v1145
    %v1315 = vunpack.c.h.b16 %v1145
    %v1316 = vunpack.c.l.b16 %v1146
    %v1317 = vunpack.c.h.b16 %v1146
    %v1318 = vunpack.c.l.b16 %v1147
    %v1319 = vunpack.c.h.b16 %v1147
    %v1320 = vunpack.c.l.b16 %v1148
    %v1321 = vunpack.c.h.b16 %v1148
    %v1322 = vunpack.c.l.b16 %v1149
    %v1323 = vunpack.c.h.b16 %v1149
    %v1324 = vunpack.c.l.b16 %v1150
    %v1325 = vunpack.c.h.b16 %v1150
    %v1326 = vunpack.c.l.b16 %v1151
    %v1327 = vunpack.c.h.b16 %v1151
    %v1328 = vunpack.c.l.b16 %v1152
    %v1329 = vunpack.c.h.b16 %v1152
    %v1330 = vunpack.c.l.b16 %v1153
    %v1331 = vunpack.c.h.b16 %v1153
    %v1332 = vunpack.c.l.b16 %v1154
    %v1333 = vunpack.c.h.b16 %v1154
    %v1334 = vunpack.c.l.b16 %v1155
    %v1335 = vunpack.c.h.b16 %v1155
    %v1336 = vunpack.c.l.b16 %v1156
    %v1337 = vunpack.c.h.b16 %v1156
    %v1338 = vunpack.c.l.b16 %v1157
    %v1339 = vunpack.c.h.b16 %v1157
    %v1340 = vunpack.c.l.b16 %v1158
    %v1341 = vunpack.c.h.b16 %v1158
    %v1342 = vunpack.c.l.b16 %v1159
    %v1343 = vunpack.c.h.b16 %v1159
    %v1344 = vunpack.c.l.b16 %v1160
    %v1345 = vunpack.c.h.b16 %v1160
    %v1346 = vunpack.c.l.b16 %v1161
    %v1347 = vunpack.c.h.b16 %v1161
    %v1348 = vunpack.c.l.b16 %v1162
    %v1349 = vunpack.c.h.b16 %v1162
    %v1350 = vunpack.c.l.b16 %v1163
    %v1351 = vunpack.c.h.b16 %v1163
    %v1352 = vunpack.c.l.b16 %v1164
    %v1353 = vunpack.c.h.b16 %v1164
    %v1354 = vunpack.c.l.b16 %v1165
    %v1355 = vunpack.c.h.b16 %v1165
    %v1356 = vunpack.c.l.b16 %v1166
    %v1357 = vunpack.c.h.b16 %v1166
    %v1358 = vunpack.c.l.b16 %v1167
    %v1359 = vunpack.c.h.b16 %v1167
    %v1360 = vunpack.c.l.b16 %v1168
    %v1361 = vunpack.c.h.b16 %v1168
    %v1362 = vunpack.c.l.b16 %v1169
    %v1363 = vunpack.c.h.b16 %v1169
    %v1364 = vunpack.c.l.b16 %v1170
    %v1365 = vunpack.c.h.b16 %v1170
    %v1366 = vunpack.c.l.b16 %v1171
    %v1367 = vunpack.c.h.b16 %v1171
    %v1368 = vunpack.c.l.b16 %v1172
    %v1369 = vunpack.c.h.b16 %v1172
    %v1370 = vunpack.c.l.b16 %v1173
    %v1371 = vunpack.c.h.b16 %v1173
    %v1372 = vunpack.c.l.b16 %v1174
    %v1373 = vunpack.c.h.b16 %v1174
    %v1374 = vunpack.c.l.b16 %v1175
    %v1375 = vunpack.c.h.b16 %v1175
    %v1376 = vunpack.c.l.b16 %v1176
    %v1377 = vunpack.c.h.b16 %v1176
    %v1378 = vunpack.c.l.b16 %v1177
    %v1379 = vunpack.c.h.b16 %v1177
    %v1380 = vunpack.c.l.b16 %v1178
    %v1381 = vunpack.c.h.b16 %v1178
    %v1382 = vunpack.c.l.b16 %v1179
    %v1383 = vunpack.c.h.b16 %v1179
    %v1384 = vunpack.c.l.b16 %v1180
    %v1385 = vunpack.c.h.b16 %v1180
    %v1386 = vunpack.c.l.b16 %v1181
    %v1387 = vunpack.c.h.b16 %v1181
    %v1388 = vunpack.c.l.b16 %v1182
    %v1389 = vunpack.c.h.b16 %v1182
    %v1390 = vunpack.c.l.b16 %v1183
    %v1391 = vunpack.c.h.b16 %v1183
    %v1392 = vunpack.c.l.b16 %v1184
    %v1393 = vunpack.c.h.b16 %v1184
    %v1394 = vunpack.c.l.b16 %v1185
    %v1395 = vunpack.c.h.b16 %v1185
    %v1396 = vunpack.c.l.b16 %v1186
    %v1397 = vunpack.c.h.b16 %v1186
    %v1398 = vunpack.c.l.b16 %v1187
    %v1399 = vunpack.c.h.b16 %v1187
    %v1400 = vunpack.c.l.b16 %v1188
    %v1401 = vunpack.c.h.b16 %v1188
    %v1402 = vunpack.c.l.b16 %v1189
    %v1403 = vunpack.c.h.b16 %v1189
    %v1404 = vunpack.c.l.b16 %v1190
    %v1405 = vunpack.c.h.b16 %v1190
    %v1406 = vpack.c.b16 %v1282, %v1278
    %v1407 = vpack.c.b16 %v1283, %v1279
    %v1408 = vpack.c.b16 %v1284, %v1280
    %v1409 = vpack.c.b16 %v1285, %v1281
    %v1410 = vpack.c.b16 %v1290, %v1286
    %v1411 = vpack.c.b16 %v1291, %v1287
    %v1412 = vpack.c.b16 %v1292, %v1288
    %v1413 = vpack.c.b16 %v1293, %v1289
    %v1414 = vpack.c.b16 %v1298, %v1294
    %v1415 = vpack.c.b16 %v1299, %v1295
    %v1416 = vpack.c.b16 %v1300, %v1296
    %v1417 = vpack.c.b16 %v1301, %v1297
    %v1418 = vpack.c.b16 %v1306, %v1302
    %v1419 = vpack.c.b16 %v1307, %v1303
    %v1420 = vpack.c.b16 %v1308, %v1304
    %v1421 = vpack.c.b16 %v1309, %v1305
    %v1422 = vpack.c.b16 %v1314, %v1310
    %v1423 = vpack.c.b16 %v1315, %v1311
    %v1424 = vpack.c.b16 %v1316, %v1312
    %v1425 = vpack.c.b16 %v1317, %v1313
    %v1426 = vpack.c.b16 %v1322, %v1318
    %v1427 = vpack.c.b16 %v1323, %v1319
    %v1428 = vpack.c.b16 %v1324, %v1320
    %v1429 = vpack.c.b16 %v1325, %v1321
    %v1430 = vpack.c.b16 %v1330, %v1326
    %v1431 = vpack.c.b16 %v1331, %v1327
    %v1432 = vpack.c.b16 %v1332, %v1328
    %v1433 = vpack.c.b16 %v1333, %v1329
    %v1434 = vpack.c.b16 %v1338, %v1334
    %v1435 = vpack.c.b16 %v1339, %v1335
    %v1436 = vpack.c.b16 %v1340, %v1336
    %v1437 = vpack.c.b16 %v1341, %v1337
    %v1438 = vpack.c.b16 %v1346, %v1342
    %v1439 = vpack.c.b16 %v1347, %v1343
    %v1440 = vpack.c.b16 %v1348, %v1344
    %v1441 = vpack.c.b16 %v1349, %v1345
    %v1442 = vpack.c.b16 %v1354, %v1350
    %v1443 = vpack.c.b16 %v1355, %v1351
    %v1444 = vpack.c.b16 %v1356, %v1352
    %v1445 = vpack.c.b16 %v1357, %v1353
    %v1446 = vpack.c.b16 %v1362, %v1358
    %v1447 = vpack.c.b16 %v1363, %v1359
    %v1448 = vpack.c.b16 %v1364, %v1360
    %v1449 = vpack.c.b16 %v1365, %v1361
    %v1450 = vpack.c.b16 %v1370, %v1366
    %v1451 = vpack.c.b16 %v1371, %v1367
    %v1452 = vpack.c.b16 %v1372, %v1368
    %v1453 = vpack.c.b16 %v1373, %v1369
    %v1454 = vpack.c.b16 %v1378, %v1374
    %v1455 = vpack.c.b16 %v1379, %v1375
    %v1456 = vpack.c.b16 %v1380, %v1376
    %v1457 = vpack.c.b16 %v1381, %v1377
    %v1458 = vpack.c.b16 %v1386, %v1382
    %v1459 = vpack.c.b16 %v1387, %v1383
    %v1460 = vpack.c.b16 %v1388, %v1384
    %v1461 = vpack.c.b16 %v1389, %v1385
    %v1462 = vpack.c.b16 %v1394, %v1390
    %v1463 = vpack.c.b16 %v1395, %v1391
    %v1464 = vpack.c.b16 %v1396, %v1392
    %v1465 = vpack.c.b16 %v1397, %v1393
    %v1466 = vpack.c.b16 %v1402, %v1398
    %v1467 = vpack.c.b16 %v1403, %v1399
    %v1468 = vpack.c.b16 %v1404, %v1400
    %v1469 = vpack.c.b16 %v1405, %v1401
    %1534 = vmatprep.subr.bf16.mxu0 %v1435
    %1535 = vmatpush1.bf16.msra.mxu0 %v1434
    %1536 = vmatprep.subr.bf16.mxu0 %v1431
    %1537 = vmatpush1.bf16.msra.mxu0 %v1430
    %1538 = vmatprep.subr.bf16.mxu0 %v1427
    %1539 = vmatpush1.bf16.msra.mxu0 %v1426
    %1540 = vmatprep.subr.bf16.mxu0 %v1423
    %1541 = vmatpush1.bf16.msra.mxu0 %v1422
    %1542 = vmatprep.subr.bf16.mxu0 %v1419
    %1543 = vmatpush1.bf16.msra.mxu0 %v1418
    %1544 = vmatprep.subr.bf16.mxu0 %v1415
    %1545 = vmatpush1.bf16.msra.mxu0 %v1414
    %1546 = vmatprep.subr.bf16.mxu0 %v1411
    %1547 = vmatpush1.bf16.msra.mxu0 %v1410
    %1548 = vmatprep.subr.bf16.mxu0 %v1407
    %1549 = vmatpush1.bf16.msra.mxu0 %v1406
    %1550 = vmatprep.subr.bf16.mxu0 %v1467
    %1551 = vmatpush2.bf16.msra.mxu0 %v1466
    %1552 = vmatprep.subr.bf16.mxu0 %v1463
    %1553 = vmatpush2.bf16.msra.mxu0 %v1462
    %1554 = vmatprep.subr.bf16.mxu0 %v1459
    %1555 = vmatpush2.bf16.msra.mxu0 %v1458
    %1556 = vmatprep.subr.bf16.mxu0 %v1455
    %1557 = vmatpush2.bf16.msra.mxu0 %v1454
    %1558 = vmatprep.subr.bf16.mxu0 %v1451
    %1559 = vmatpush2.bf16.msra.mxu0 %v1450
    %1560 = vmatprep.subr.bf16.mxu0 %v1447
    %1561 = vmatpush2.bf16.msra.mxu0 %v1446
    %1562 = vmatprep.subr.bf16.mxu0 %v1443
    %1563 = vmatpush2.bf16.msra.mxu0 %v1442
    %1564 = vmatprep.subr.bf16.mxu0 %v1439
    %1565 = vmatpush2.bf16.msra.mxu0 %v1438
    %1566 = vmatprep.mubr.bf16.mxu0 %v1125
    %1567 = vmatmul.mubr.bf16.gmra.mxu0 %v1124
    %v1568 = vpop.f32.mrf.mxu0
    %v1569 = vadd.f32 %v1197, %v1568
    %v1570 = vpop.f32.mrf.mxu0
    %v1571 = vadd.f32 %v1201, %v1570
    %v1572 = vpop.f32.mrf.mxu0
    %v1573 = vpop.f32.mrf.mxu0
    %1574 = vdwg.mxu0
    %1575 = vmatprep.subr.bf16.mxu0 %v1437
    %1576 = vmatpush1.bf16.msra.mxu0 %v1436
    %1577 = vmatprep.subr.bf16.mxu0 %v1433
    %1578 = vmatpush1.bf16.msra.mxu0 %v1432
    %1579 = vmatprep.subr.bf16.mxu0 %v1429
    %1580 = vmatpush1.bf16.msra.mxu0 %v1428
    %1581 = vmatprep.subr.bf16.mxu0 %v1425
    %1582 = vmatpush1.bf16.msra.mxu0 %v1424
    %1583 = vmatprep.subr.bf16.mxu0 %v1421
    %1584 = vmatpush1.bf16.msra.mxu0 %v1420
    %1585 = vmatprep.subr.bf16.mxu0 %v1417
    %1586 = vmatpush1.bf16.msra.mxu0 %v1416
    %1587 = vmatprep.subr.bf16.mxu0 %v1413
    %1588 = vmatpush1.bf16.msra.mxu0 %v1412
    %1589 = vmatprep.subr.bf16.mxu0 %v1409
    %1590 = vmatpush1.bf16.msra.mxu0 %v1408
    %1591 = vmatprep.subr.bf16.mxu0 %v1469
    %1592 = vmatpush2.bf16.msra.mxu0 %v1468
    %1593 = vmatprep.subr.bf16.mxu0 %v1465
    %1594 = vmatpush2.bf16.msra.mxu0 %v1464
    %1595 = vmatprep.subr.bf16.mxu0 %v1461
    %1596 = vmatpush2.bf16.msra.mxu0 %v1460
    %1597 = vmatprep.subr.bf16.mxu0 %v1457
    %1598 = vmatpush2.bf16.msra.mxu0 %v1456
    %1599 = vmatprep.subr.bf16.mxu0 %v1453
    %1600 = vmatpush2.bf16.msra.mxu0 %v1452
    %1601 = vmatprep.subr.bf16.mxu0 %v1449
    %1602 = vmatpush2.bf16.msra.mxu0 %v1448
    %1603 = vmatprep.subr.bf16.mxu0 %v1445
    %1604 = vmatpush2.bf16.msra.mxu0 %v1444
    %1605 = vmatprep.subr.bf16.mxu0 %v1441
    %1606 = vmatpush2.bf16.msra.mxu0 %v1440
    %1607 = vmatprep.mubr.bf16.mxu0 %v1125
    %1608 = vmatmul.mubr.bf16.gmra.mxu0 %v1124
    %v1609 = vpop.f32.mrf.mxu0
    %v1610 = vadd.f32 %v1205, %v1609
    %v1611 = vpop.f32.mrf.mxu0
    %v1612 = vadd.f32 %v1209, %v1611
    %v1613 = vpop.f32.mrf.mxu0
    %v1614 = vpop.f32.mrf.mxu0
    %1615 = vdwg.mxu0
    %v1616 = vxor.u32 %v1569, 2147483648
    %v1617 = vmul.f32 %v1616, 1.442695
    %v1618 = vpow.pop %v1617
    %v1619 = vadd.f32 %v1618, 1.0
    %v1620 = vrcp.pop %v1619
    %v1621 = vmul.f32 1.0, %v1620
    %v1622 = vxor.u32 %v1571, 2147483648
    %v1623 = vmul.f32 %v1622, 1.442695
    %v1624 = vpow.pop %v1623
    %v1625 = vadd.f32 %v1624, 1.0
    %v1626 = vrcp.pop %v1625
    %v1627 = vmul.f32 1.0, %v1626
    %v1628 = vtanh.pop %v1610
    %v1629 = vxor.u32 %v1612, 2147483648
    %v1630 = vmul.f32 %v1629, 1.442695
    %v1631 = vpow.pop %v1630
    %v1632 = vadd.f32 %v1631, 1.0
    %v1633 = vrcp.pop %v1632
    %v1634 = vmul.f32 1.0, %v1633
    %v1635 = vmul.f32 %v1627, %v1123
    %v1636 = vmul.f32 %v1621, %v1628
    %v1637 = vadd.f32 %v1635, %v1636
    %v1638 = vtanh.pop %v1637
    %v1639 = vmul.f32 %v1634, %v1638
    %1640 = vst [vmem:[%s1118] sm:$0xff] %v1639
    %1641 = vst [vmem:[%s1121] sm:$0xff] %v1637
    %1642 = vst [vmem:[#allocation6] sm:$0xff] %v1639
    // Predicated region
    $region34: #{lstm_net_forward.1} parent=1 // pred_check
      %p1643 = pneg %p41
    $region35: #{lstm_net_forward.1} parent=1 // pred_check_branch
      %1645 = sbr.rel (%p1643) target = $region37
    $region36: #{lstm_net_forward.1} parent=1 // pred_region
      %v1646 = vld [vmem:[#allocation2] sm:$0xff]
      %v1648 = vcombine.high %v1646, %v1646
      %v1650 = vunpack.c.l.s4 1966171168
      %v1651 = vunpack.c.0.s8 %v1650
      %v1652 = vlaneseq
      %v1653 = vshrl.u32 %v1652, 7
      %v1654 = vsub.s32 %v1651, %v1653
      %v1655 = vrot.slane %v1646, %v1654
      %v1657 = vunpack.c.l.s4 1966171168
      %v1658 = vunpack.c.0.s8 %v1657
      %v1659 = vlaneseq
      %v1660 = vshrl.u32 %v1659, 7
      %v1661 = vsub.s32 %v1658, %v1660
      %v1662 = vrot.slane %v1648, %v1661
      %v1663 = vcombine.high %v1655, %v1655
      %v1664 = vcombine.high %v1662, %v1662
      %v1666 = vunpack.c.l.s4 1966171168
      %v1667 = vunpack.c.0.s8 %v1666
      %v1668 = vlaneseq
      %v1669 = vshrl.u32 %v1668, 7
      %v1670 = vsub.s32 %v1667, %v1669
      %v1671 = vrot.slane %v1655, %v1670
      %v1673 = vunpack.c.l.s4 1966171168
      %v1674 = vunpack.c.0.s8 %v1673
      %v1675 = vlaneseq
      %v1676 = vshrl.u32 %v1675, 7
      %v1677 = vsub.s32 %v1674, %v1676
      %v1678 = vrot.slane %v1662, %v1677
      %v1680 = vunpack.c.l.s4 1966171168
      %v1681 = vunpack.c.0.s8 %v1680
      %v1682 = vlaneseq
      %v1683 = vshrl.u32 %v1682, 7
      %v1684 = vsub.s32 %v1681, %v1683
      %v1685 = vrot.slane %v1663, %v1684
      %v1687 = vunpack.c.l.s4 1966171168
      %v1688 = vunpack.c.0.s8 %v1687
      %v1689 = vlaneseq
      %v1690 = vshrl.u32 %v1689, 7
      %v1691 = vsub.s32 %v1688, %v1690
      %v1692 = vrot.slane %v1664, %v1691
      %v1693 = vcombine.high %v1671, %v1671
      %v1694 = vcombine.high %v1678, %v1678
      %v1695 = vcombine.high %v1685, %v1685
      %v1696 = vcombine.high %v1692, %v1692
      %1705 = vst [vmem:[%s7] sm:$0x1] %v1671
      %1706 = vst [vmem:[%s7 + $0x8] sm:$0x1] %v1685
      %1707 = vst [vmem:[%s7 + $0x10] sm:$0x1] %v1693
      %1708 = vst [vmem:[%s7 + $0x18] sm:$0x1] %v1695
      %1709 = vst [vmem:[%s7 + $0x20] sm:$0x1] %v1678
      %1710 = vst [vmem:[%s7 + $0x28] sm:$0x1] %v1692
      %1711 = vst [vmem:[%s7 + $0x30] sm:$0x1] %v1694
      %1712 = vst [vmem:[%s7 + $0x38] sm:$0x1] %v1696
      %v1713 = vld [vmem:[%s595] sm:$0xff]
      %v1715 = vcombine.high %v1713, %v1713
      %v1717 = vunpack.c.l.s4 1966171168
      %v1718 = vunpack.c.0.s8 %v1717
      %v1719 = vlaneseq
      %v1720 = vshrl.u32 %v1719, 7
      %v1721 = vsub.s32 %v1718, %v1720
      %v1722 = vrot.slane %v1713, %v1721
      %v1724 = vunpack.c.l.s4 1966171168
      %v1725 = vunpack.c.0.s8 %v1724
      %v1726 = vlaneseq
      %v1727 = vshrl.u32 %v1726, 7
      %v1728 = vsub.s32 %v1725, %v1727
      %v1729 = vrot.slane %v1715, %v1728
      %v1730 = vcombine.high %v1722, %v1722
      %v1731 = vcombine.high %v1729, %v1729
      %v1733 = vunpack.c.l.s4 1966171168
      %v1734 = vunpack.c.0.s8 %v1733
      %v1735 = vlaneseq
      %v1736 = vshrl.u32 %v1735, 7
      %v1737 = vsub.s32 %v1734, %v1736
      %v1738 = vrot.slane %v1722, %v1737
      %v1740 = vunpack.c.l.s4 1966171168
      %v1741 = vunpack.c.0.s8 %v1740
      %v1742 = vlaneseq
      %v1743 = vshrl.u32 %v1742, 7
      %v1744 = vsub.s32 %v1741, %v1743
      %v1745 = vrot.slane %v1729, %v1744
      %v1747 = vunpack.c.l.s4 1966171168
      %v1748 = vunpack.c.0.s8 %v1747
      %v1749 = vlaneseq
      %v1750 = vshrl.u32 %v1749, 7
      %v1751 = vsub.s32 %v1748, %v1750
      %v1752 = vrot.slane %v1730, %v1751
      %v1754 = vunpack.c.l.s4 1966171168
      %v1755 = vunpack.c.0.s8 %v1754
      %v1756 = vlaneseq
      %v1757 = vshrl.u32 %v1756, 7
      %v1758 = vsub.s32 %v1755, %v1757
      %v1759 = vrot.slane %v1731, %v1758
      %v1760 = vcombine.high %v1738, %v1738
      %v1761 = vcombine.high %v1745, %v1745
      %v1762 = vcombine.high %v1752, %v1752
      %v1763 = vcombine.high %v1759, %v1759
      %1772 = vst [vmem:[%s7 + $0x1] sm:$0x1] %v1738
      %1773 = vst [vmem:[%s7 + $0x9] sm:$0x1] %v1752
      %1774 = vst [vmem:[%s7 + $0x11] sm:$0x1] %v1760
      %1775 = vst [vmem:[%s7 + $0x19] sm:$0x1] %v1762
      %1776 = vst [vmem:[%s7 + $0x21] sm:$0x1] %v1745
      %1777 = vst [vmem:[%s7 + $0x29] sm:$0x1] %v1759
      %1778 = vst [vmem:[%s7 + $0x31] sm:$0x1] %v1761
      %1779 = vst [vmem:[%s7 + $0x39] sm:$0x1] %v1763
      %v1780 = vld [vmem:[%s1118] sm:$0xff]
      %v1782 = vcombine.high %v1780, %v1780
      %v1784 = vunpack.c.l.s4 1966171168
      %v1785 = vunpack.c.0.s8 %v1784
      %v1786 = vlaneseq
      %v1787 = vshrl.u32 %v1786, 7
      %v1788 = vsub.s32 %v1785, %v1787
      %v1789 = vrot.slane %v1780, %v1788
      %v1791 = vunpack.c.l.s4 1966171168
      %v1792 = vunpack.c.0.s8 %v1791
      %v1793 = vlaneseq
      %v1794 = vshrl.u32 %v1793, 7
      %v1795 = vsub.s32 %v1792, %v1794
      %v1796 = vrot.slane %v1782, %v1795
      %v1797 = vcombine.high %v1789, %v1789
      %v1798 = vcombine.high %v1796, %v1796
      %v1800 = vunpack.c.l.s4 1966171168
      %v1801 = vunpack.c.0.s8 %v1800
      %v1802 = vlaneseq
      %v1803 = vshrl.u32 %v1802, 7
      %v1804 = vsub.s32 %v1801, %v1803
      %v1805 = vrot.slane %v1789, %v1804
      %v1807 = vunpack.c.l.s4 1966171168
      %v1808 = vunpack.c.0.s8 %v1807
      %v1809 = vlaneseq
      %v1810 = vshrl.u32 %v1809, 7
      %v1811 = vsub.s32 %v1808, %v1810
      %v1812 = vrot.slane %v1796, %v1811
      %v1814 = vunpack.c.l.s4 1966171168
      %v1815 = vunpack.c.0.s8 %v1814
      %v1816 = vlaneseq
      %v1817 = vshrl.u32 %v1816, 7
      %v1818 = vsub.s32 %v1815, %v1817
      %v1819 = vrot.slane %v1797, %v1818
      %v1821 = vunpack.c.l.s4 1966171168
      %v1822 = vunpack.c.0.s8 %v1821
      %v1823 = vlaneseq
      %v1824 = vshrl.u32 %v1823, 7
      %v1825 = vsub.s32 %v1822, %v1824
      %v1826 = vrot.slane %v1798, %v1825
      %v1827 = vcombine.high %v1805, %v1805
      %v1828 = vcombine.high %v1812, %v1812
      %v1829 = vcombine.high %v1819, %v1819
      %v1830 = vcombine.high %v1826, %v1826
      %1839 = vst [vmem:[%s7 + $0x2] sm:$0x1] %v1805
      %1840 = vst [vmem:[%s7 + $0xa] sm:$0x1] %v1819
      %1841 = vst [vmem:[%s7 + $0x12] sm:$0x1] %v1827
      %1842 = vst [vmem:[%s7 + $0x1a] sm:$0x1] %v1829
      %1843 = vst [vmem:[%s7 + $0x22] sm:$0x1] %v1812
      %1844 = vst [vmem:[%s7 + $0x2a] sm:$0x1] %v1826
      %1845 = vst [vmem:[%s7 + $0x32] sm:$0x1] %v1828
      %1846 = vst [vmem:[%s7 + $0x3a] sm:$0x1] %v1830
      %v1847 = vld [vmem:[%s257] sm:$0xff]
      %v1849 = vcombine.high %v1847, %v1847
      %v1851 = vunpack.c.l.s4 1966171168
      %v1852 = vunpack.c.0.s8 %v1851
      %v1853 = vlaneseq
      %v1854 = vshrl.u32 %v1853, 7
      %v1855 = vsub.s32 %v1852, %v1854
      %v1856 = vrot.slane %v1847, %v1855
      %v1858 = vunpack.c.l.s4 1966171168
      %v1859 = vunpack.c.0.s8 %v1858
      %v1860 = vlaneseq
      %v1861 = vshrl.u32 %v1860, 7
      %v1862 = vsub.s32 %v1859, %v1861
      %v1863 = vrot.slane %v1849, %v1862
      %v1864 = vcombine.high %v1856, %v1856
      %v1865 = vcombine.high %v1863, %v1863
      %v1867 = vunpack.c.l.s4 1966171168
      %v1868 = vunpack.c.0.s8 %v1867
      %v1869 = vlaneseq
      %v1870 = vshrl.u32 %v1869, 7
      %v1871 = vsub.s32 %v1868, %v1870
      %v1872 = vrot.slane %v1856, %v1871
      %v1874 = vunpack.c.l.s4 1966171168
      %v1875 = vunpack.c.0.s8 %v1874
      %v1876 = vlaneseq
      %v1877 = vshrl.u32 %v1876, 7
      %v1878 = vsub.s32 %v1875, %v1877
      %v1879 = vrot.slane %v1863, %v1878
      %v1881 = vunpack.c.l.s4 1966171168
      %v1882 = vunpack.c.0.s8 %v1881
      %v1883 = vlaneseq
      %v1884 = vshrl.u32 %v1883, 7
      %v1885 = vsub.s32 %v1882, %v1884
      %v1886 = vrot.slane %v1864, %v1885
      %v1888 = vunpack.c.l.s4 1966171168
      %v1889 = vunpack.c.0.s8 %v1888
      %v1890 = vlaneseq
      %v1891 = vshrl.u32 %v1890, 7
      %v1892 = vsub.s32 %v1889, %v1891
      %v1893 = vrot.slane %v1865, %v1892
      %v1894 = vcombine.high %v1872, %v1872
      %v1895 = vcombine.high %v1879, %v1879
      %v1896 = vcombine.high %v1886, %v1886
      %v1897 = vcombine.high %v1893, %v1893
      %1906 = vst [vmem:[%s7 + $0x3] sm:$0x1] %v1872
      %1907 = vst [vmem:[%s7 + $0xb] sm:$0x1] %v1886
      %1908 = vst [vmem:[%s7 + $0x13] sm:$0x1] %v1894
      %1909 = vst [vmem:[%s7 + $0x1b] sm:$0x1] %v1896
      %1910 = vst [vmem:[%s7 + $0x23] sm:$0x1] %v1879
      %1911 = vst [vmem:[%s7 + $0x2b] sm:$0x1] %v1893
      %1912 = vst [vmem:[%s7 + $0x33] sm:$0x1] %v1895
      %1913 = vst [vmem:[%s7 + $0x3b] sm:$0x1] %v1897
      %v1914 = vld [vmem:[%s598] sm:$0xff]
      %v1916 = vcombine.high %v1914, %v1914
      %v1918 = vunpack.c.l.s4 1966171168
      %v1919 = vunpack.c.0.s8 %v1918
      %v1920 = vlaneseq
      %v1921 = vshrl.u32 %v1920, 7
      %v1922 = vsub.s32 %v1919, %v1921
      %v1923 = vrot.slane %v1914, %v1922
      %v1925 = vunpack.c.l.s4 1966171168
      %v1926 = vunpack.c.0.s8 %v1925
      %v1927 = vlaneseq
      %v1928 = vshrl.u32 %v1927, 7
      %v1929 = vsub.s32 %v1926, %v1928
      %v1930 = vrot.slane %v1916, %v1929
      %v1931 = vcombine.high %v1923, %v1923
      %v1932 = vcombine.high %v1930, %v1930
      %v1934 = vunpack.c.l.s4 1966171168
      %v1935 = vunpack.c.0.s8 %v1934
      %v1936 = vlaneseq
      %v1937 = vshrl.u32 %v1936, 7
      %v1938 = vsub.s32 %v1935, %v1937
      %v1939 = vrot.slane %v1923, %v1938
      %v1941 = vunpack.c.l.s4 1966171168
      %v1942 = vunpack.c.0.s8 %v1941
      %v1943 = vlaneseq
      %v1944 = vshrl.u32 %v1943, 7
      %v1945 = vsub.s32 %v1942, %v1944
      %v1946 = vrot.slane %v1930, %v1945
      %v1948 = vunpack.c.l.s4 1966171168
      %v1949 = vunpack.c.0.s8 %v1948
      %v1950 = vlaneseq
      %v1951 = vshrl.u32 %v1950, 7
      %v1952 = vsub.s32 %v1949, %v1951
      %v1953 = vrot.slane %v1931, %v1952
      %v1955 = vunpack.c.l.s4 1966171168
      %v1956 = vunpack.c.0.s8 %v1955
      %v1957 = vlaneseq
      %v1958 = vshrl.u32 %v1957, 7
      %v1959 = vsub.s32 %v1956, %v1958
      %v1960 = vrot.slane %v1932, %v1959
      %v1961 = vcombine.high %v1939, %v1939
      %v1962 = vcombine.high %v1946, %v1946
      %v1963 = vcombine.high %v1953, %v1953
      %v1964 = vcombine.high %v1960, %v1960
      %1973 = vst [vmem:[%s7 + $0x4] sm:$0x1] %v1939
      %1974 = vst [vmem:[%s7 + $0xc] sm:$0x1] %v1953
      %1975 = vst [vmem:[%s7 + $0x14] sm:$0x1] %v1961
      %1976 = vst [vmem:[%s7 + $0x1c] sm:$0x1] %v1963
      %1977 = vst [vmem:[%s7 + $0x24] sm:$0x1] %v1946
      %1978 = vst [vmem:[%s7 + $0x2c] sm:$0x1] %v1960
      %1979 = vst [vmem:[%s7 + $0x34] sm:$0x1] %v1962
      %1980 = vst [vmem:[%s7 + $0x3c] sm:$0x1] %v1964
      %v1981 = vld [vmem:[%s1121] sm:$0xff]
      %v1983 = vcombine.high %v1981, %v1981
      %v1985 = vunpack.c.l.s4 1966171168
      %v1986 = vunpack.c.0.s8 %v1985
      %v1987 = vlaneseq
      %v1988 = vshrl.u32 %v1987, 7
      %v1989 = vsub.s32 %v1986, %v1988
      %v1990 = vrot.slane %v1981, %v1989
      %v1992 = vunpack.c.l.s4 1966171168
      %v1993 = vunpack.c.0.s8 %v1992
      %v1994 = vlaneseq
      %v1995 = vshrl.u32 %v1994, 7
      %v1996 = vsub.s32 %v1993, %v1995
      %v1997 = vrot.slane %v1983, %v1996
      %v1998 = vcombine.high %v1990, %v1990
      %v1999 = vcombine.high %v1997, %v1997
      %v2001 = vunpack.c.l.s4 1966171168
      %v2002 = vunpack.c.0.s8 %v2001
      %v2003 = vlaneseq
      %v2004 = vshrl.u32 %v2003, 7
      %v2005 = vsub.s32 %v2002, %v2004
      %v2006 = vrot.slane %v1990, %v2005
      %v2008 = vunpack.c.l.s4 1966171168
      %v2009 = vunpack.c.0.s8 %v2008
      %v2010 = vlaneseq
      %v2011 = vshrl.u32 %v2010, 7
      %v2012 = vsub.s32 %v2009, %v2011
      %v2013 = vrot.slane %v1997, %v2012
      %v2015 = vunpack.c.l.s4 1966171168
      %v2016 = vunpack.c.0.s8 %v2015
      %v2017 = vlaneseq
      %v2018 = vshrl.u32 %v2017, 7
      %v2019 = vsub.s32 %v2016, %v2018
      %v2020 = vrot.slane %v1998, %v2019
      %v2022 = vunpack.c.l.s4 1966171168
      %v2023 = vunpack.c.0.s8 %v2022
      %v2024 = vlaneseq
      %v2025 = vshrl.u32 %v2024, 7
      %v2026 = vsub.s32 %v2023, %v2025
      %v2027 = vrot.slane %v1999, %v2026
      %v2028 = vcombine.high %v2006, %v2006
      %v2029 = vcombine.high %v2013, %v2013
      %v2030 = vcombine.high %v2020, %v2020
      %v2031 = vcombine.high %v2027, %v2027
      %2040 = vst [vmem:[%s7 + $0x5] sm:$0x1] %v2006
      %2041 = vst [vmem:[%s7 + $0xd] sm:$0x1] %v2020
      %2042 = vst [vmem:[%s7 + $0x15] sm:$0x1] %v2028
      %2043 = vst [vmem:[%s7 + $0x1d] sm:$0x1] %v2030
      %2044 = vst [vmem:[%s7 + $0x25] sm:$0x1] %v2013
      %2045 = vst [vmem:[%s7 + $0x2d] sm:$0x1] %v2027
      %2046 = vst [vmem:[%s7 + $0x35] sm:$0x1] %v2029
      %2047 = vst [vmem:[%s7 + $0x3d] sm:$0x1] %v2031
    $region37: #{lstm_net_forward.1} parent=1 // pred_fallthru
      _
    // Predicated region
    $region38: #{lstm_net_forward.1} parent=1 // pred_check
      _
    $region39: #{lstm_net_forward.1} parent=1 // pred_check_branch
      %2049 = sbr.rel (0) target = $region41
    $region40: #{lstm_net_forward.1} parent=1 // pred_region
      %s2051 = ssub.s32 128, 128
      %2052 = vsyncadd [#allocation5], %s2051
      %s2054 = sshll.u32 [#allocation6], 4
      %s2055 = int_to_ptr.vmem [resolvable:$true] %s2054
      %2057 = dma.vmem_to_hbm [thread:$0]  %s2055, 128, %s6, [#allocation5]
    $region41: #{lstm_net_forward.1} parent=1 // pred_fallthru
      _
    // Predicated region
    $region42: #{lstm_net_forward.1} parent=1 // pred_check
      _
    $region43: #{lstm_net_forward.1} parent=1 // pred_check_branch
      %2059 = sbr.rel (0) target = $region45
    $region44: #{lstm_net_forward.1} parent=1 // pred_region
      _
    $region45: #{lstm_net_forward.1} parent=1 // pred_fallthru
      _
    // Predicated region
    $region46: #{lstm_net_forward.1} parent=1 // pred_check
      _
    $region47: #{lstm_net_forward.1} parent=1 // pred_check_branch
      %2061 = sbr.rel (0) target = $region49
    $region48: #{lstm_net_forward.1} parent=1 // pred_region
      %2062 = dma.done [#allocation5], 128
    $region49: #{lstm_net_forward.1} parent=1 // pred_fallthru
      _
    // Predicated region
    $region50: #{lstm_net_forward.1} parent=1 // pred_check
      _
    $region51: #{lstm_net_forward.1} parent=1 // pred_check_branch
      %2064 = sbr.rel (0) target = $region53
    $region52: #{lstm_net_forward.1} parent=1 // pred_region
      _
    $region53: #{lstm_net_forward.1} parent=1 // pred_fallthru
      _
    %2065 = vsyncpa [#allocation4], 1
    %2066 = vsyncpa [#allocation5], 1

</llo_original>
